<compile_context>
chip_gen: v6e
topology: v6e:2x2x1
jax: 0.10.0
libtpu: 0.0.40
codegen_flags: <defaults>
</compile_context>

<pallas_src>
import functools

import jax
import jax.numpy as jnp
from jax.experimental import pallas as pl
from jax.experimental.pallas import tpu as pltpu

# Logical dims (the reference module uses globals n_in, n_h1, n_h2, n_out).
N_IN, N_H1, N_H2, N_OUT = 32, 64, 32, 16

# Lane-padded dims (multiples of 128 so every operand / output tile is lane-dense).
N_IN_P, N_H1_P, N_H2_P, N_OUT_P = 128, 128, 128, 128

TILE_B = 256      # batch rows per grid step
BATCH = 1024      # demo batch (kernel handles any batch via padding)


def fc_kernel(x_ref, w1_ref, b1_ref, w2_ref, b2_ref, w3_ref, b3_ref,
              out_ref, x1_ref):
    x = x_ref[...]                                           # (TILE_B, 128) bf16

    # l1 + ReLU  (x1 is also a module output)
    h1 = jnp.dot(x, w1_ref[...], preferred_element_type=jnp.float32) + b1_ref[...]
    x1 = jnp.maximum(h1, 0.0)
    # Store x1 BEFORE the remaining matmuls: with a single vector-store slot (v5e)
    # the scheduler hides this store under the l2/l3 MXU work.
    x1_ref[...] = x1.astype(x1_ref.dtype)

    # l2 + ReLU (bf16 MXU inputs, f32 accumulate + f32 epilogue)
    h2 = jnp.dot(x1.astype(jnp.bfloat16), w2_ref[...],
                 preferred_element_type=jnp.float32) + b2_ref[...]
    h2 = jnp.maximum(h2, 0.0)

    # l3 + Sigmoid
    h3 = jnp.dot(h2.astype(jnp.bfloat16), w3_ref[...],
                 preferred_element_type=jnp.float32) + b3_ref[...]
    out_ref[...] = jax.nn.sigmoid(h3).astype(out_ref.dtype)


def _pad2(a, rows, cols):
    r, c = a.shape
    return jnp.pad(a, ((0, rows - r), (0, cols - c)))


@functools.partial(jax.jit, static_argnames=("tile_b",))
def fc_forward(x, params, tile_b=TILE_B):
    w1, b1, w2, b2, w3, b3 = params
    batch = x.shape[0]
    bp = pl.cdiv(batch, tile_b) * tile_b                     # padded batch

    # Lane / batch padding + bf16 cast for MXU inputs (biases stay f32).
    x_p = _pad2(x, bp, N_IN_P).astype(jnp.bfloat16)
    w1_p = _pad2(w1, N_IN_P, N_H1_P).astype(jnp.bfloat16)
    w2_p = _pad2(w2, N_H1_P, N_H2_P).astype(jnp.bfloat16)
    w3_p = _pad2(w3, N_H2_P, N_OUT_P).astype(jnp.bfloat16)
    b1_p = _pad2(b1, 1, N_H1_P)
    b2_p = _pad2(b2, 1, N_H2_P)
    b3_p = _pad2(b3, 1, N_OUT_P)

    grid = (bp // tile_b,)
    const = lambda i: (0, 0)

    flops = 2 * bp * (N_IN_P * N_H1_P + N_H1_P * N_H2_P + N_H2_P * N_OUT_P)
    bytes_accessed = (
        x_p.size * 2
        + (w1_p.size + w2_p.size + w3_p.size) * 2
        + (b1_p.size + b2_p.size + b3_p.size) * 4
        + bp * (N_OUT_P + N_H1_P) * 4
    )

    out_p, x1_p = pl.pallas_call(
        fc_kernel,
        grid=grid,
        in_specs=[
            pl.BlockSpec((tile_b, N_IN_P), lambda i: (i, 0)),   # x tile per step
            pl.BlockSpec((N_IN_P, N_H1_P), const),              # weights: VMEM-resident
            pl.BlockSpec((1, N_H1_P), const),
            pl.BlockSpec((N_H1_P, N_H2_P), const),
            pl.BlockSpec((1, N_H2_P), const),
            pl.BlockSpec((N_H2_P, N_OUT_P), const),
            pl.BlockSpec((1, N_OUT_P), const),
        ],
        out_specs=(
            pl.BlockSpec((tile_b, N_OUT_P), lambda i: (i, 0)),  # lane-dense outputs
            pl.BlockSpec((tile_b, N_H1_P), lambda i: (i, 0)),
        ),
        out_shape=(
            jax.ShapeDtypeStruct((bp, N_OUT_P), jnp.float32),   # sigmoid output
            jax.ShapeDtypeStruct((bp, N_H1_P), jnp.float32),    # x1 (post-ReLU of l1)
        ),
        compiler_params=pltpu.CompilerParams(
            dimension_semantics=("parallel",),                  # shard batch across TCs (v7x)
        ),
        cost_estimate=pl.CostEstimate(
            flops=flops,
            transcendentals=bp * N_OUT_P,
            bytes_accessed=bytes_accessed,
        ),
    )(x_p, w1_p, b1_p, w2_p, b2_p, w3_p, b3_p)

    # Slice away lane / batch padding outside the kernel.
    return out_p[:batch, :N_OUT], x1_p[:batch, :N_H1]


def init_params(key):
    """Deterministic PyTorch-Linear-style init: U(-1/sqrt(fan_in), 1/sqrt(fan_in)).

    Weights are stored transposed from PyTorch (in_features, out_features), so the
    kernel computes y = x @ W + b on the MXU.
    """
    ks = jax.random.split(key, 6)

    def lin(kw, kb, fan_in, fan_out):
        bound = 1.0 / jnp.sqrt(fan_in)
        w = jax.random.uniform(kw, (fan_in, fan_out), jnp.float32, -bound, bound)
        b = jax.random.uniform(kb, (1, fan_out), jnp.float32, -bound, bound)
        return w, b

    w1, b1 = lin(ks[0], ks[1], N_IN, N_H1)
    w2, b2 = lin(ks[2], ks[3], N_H1, N_H2)
    w3, b3 = lin(ks[4], ks[5], N_H2, N_OUT)
    return (w1, b1, w2, b2, w3, b3)


def fc_reference_bf16(x, params):
    """Reference with the same numerics as the kernel (bf16 MXU inputs, f32 acc)."""
    w1, b1, w2, b2, w3, b3 = params
    bf = jnp.bfloat16
    x1 = jnp.maximum(
        jnp.dot(x.astype(bf), w1.astype(bf), preferred_element_type=jnp.float32) + b1, 0.0)
    h2 = jnp.maximum(
        jnp.dot(x1.astype(bf), w2.astype(bf), preferred_element_type=jnp.float32) + b2, 0.0)
    out = jax.nn.sigmoid(
        jnp.dot(h2.astype(bf), w3.astype(bf), preferred_element_type=jnp.float32) + b3)
    return out, x1


def fc_reference_f32(x, params):
    w1, b1, w2, b2, w3, b3 = params
    x1 = jnp.maximum(x @ w1 + b1, 0.0)
    h2 = jnp.maximum(x1 @ w2 + b2, 0.0)
    return jax.nn.sigmoid(h2 @ w3 + b3), x1


if __name__ == "__main__":
    key = jax.random.PRNGKey(0)
    kx, kp = jax.random.split(key)
    x = jax.random.normal(kx, (BATCH, N_IN), jnp.float32)
    params = init_params(kp)

    out, x1 = fc_forward(x, params)
    jax.block_until_ready(out)
    jax.block_until_ready(x1)

    # Exact-numerics reference (same bf16/f32 mixed precision as the kernel).
    ref_out, ref_x1 = fc_reference_bf16(x, params)
    assert jnp.allclose(out, ref_out, atol=5e-3, rtol=5e-3)
    assert jnp.allclose(x1, ref_x1, atol=5e-3, rtol=5e-3)

    # Coarse sanity check against the pure-f32 math of the PyTorch module.
    f32_out, f32_x1 = fc_reference_f32(x, params)
    assert jnp.allclose(out, f32_out, atol=1e-1, rtol=1e-1)
    assert jnp.allclose(x1, f32_x1, atol=1e-1, rtol=1e-1)

    print("KERNEL_OK")
</pallas_src>

<mosaic_0001>
module attributes {stable_mosaic.version = 11 : i64} {
  func.func @fc_kernel(%arg0: i32, %arg1: memref<256x128xbf16, #tpu.memory_space<vmem>>, %arg2: memref<128x128xbf16, #tpu.memory_space<vmem>>, %arg3: memref<1x128xf32, #tpu.memory_space<vmem>>, %arg4: memref<128x128xbf16, #tpu.memory_space<vmem>>, %arg5: memref<1x128xf32, #tpu.memory_space<vmem>>, %arg6: memref<128x128xbf16, #tpu.memory_space<vmem>>, %arg7: memref<1x128xf32, #tpu.memory_space<vmem>>, %arg8: memref<256x128xf32, #tpu.memory_space<vmem>>, %arg9: memref<256x128xf32, #tpu.memory_space<vmem>>) attributes {dimension_semantics = [#tpu.dimension_semantics<parallel>], iteration_bounds = array<i64: 4>, scalar_prefetch = 0 : i64, scratch_operands = 0 : i64, tpu.core_type = #tpu.core_type<tc>, window_params = [{transform_indices = @transform_0, window_bounds = array<i64: 256, 128>}, {pipeline_mode = #tpu.pipeline_mode<synchronous>, transform_indices = @transform_1, window_bounds = array<i64: 128, 128>}, {pipeline_mode = #tpu.pipeline_mode<synchronous>, transform_indices = @transform_2, window_bounds = array<i64: 1, 128>}, {pipeline_mode = #tpu.pipeline_mode<synchronous>, transform_indices = @transform_3, window_bounds = array<i64: 128, 128>}, {pipeline_mode = #tpu.pipeline_mode<synchronous>, transform_indices = @transform_4, window_bounds = array<i64: 1, 128>}, {pipeline_mode = #tpu.pipeline_mode<synchronous>, transform_indices = @transform_5, window_bounds = array<i64: 128, 128>}, {pipeline_mode = #tpu.pipeline_mode<synchronous>, transform_indices = @transform_6, window_bounds = array<i64: 1, 128>}, {transform_indices = @transform_7, window_bounds = array<i64: 256, 128>}, {transform_indices = @transform_8, window_bounds = array<i64: 256, 128>}]} {
    %c0 = arith.constant 0 : index
    %c0_0 = arith.constant 0 : index
    %0 = vector.load %arg1[%c0, %c0_0] : memref<256x128xbf16, #tpu.memory_space<vmem>>, vector<256x128xbf16>
    %c0_1 = arith.constant 0 : index
    %c0_2 = arith.constant 0 : index
    %1 = vector.load %arg2[%c0_1, %c0_2] : memref<128x128xbf16, #tpu.memory_space<vmem>>, vector<128x128xbf16>
    %cst = arith.constant dense<0.000000e+00> : vector<256x128xf32>
    %2 = tpu.matmul %0, %1, %cst {dimension_numbers = #tpu.dot_dimension_numbers<[1], [0], [0], [1], [0, 0, 1, 1], [], []>} : vector<256x128xbf16>, vector<128x128xbf16>, vector<256x128xf32> -> vector<256x128xf32>
    %c0_3 = arith.constant 0 : index
    %c0_4 = arith.constant 0 : index
    %3 = vector.load %arg3[%c0_3, %c0_4] : memref<1x128xf32, #tpu.memory_space<vmem>>, vector<1x128xf32>
    %4 = vector.broadcast %3 : vector<1x128xf32> to vector<256x128xf32>
    %5 = arith.addf %2, %4 : vector<256x128xf32>
    %cst_5 = arith.constant 0.000000e+00 : f32
    %6 = vector.broadcast %cst_5 : f32 to vector<256x128xf32>
    %7 = arith.maximumf %5, %6 : vector<256x128xf32>
    %c0_6 = arith.constant 0 : index
    %c0_7 = arith.constant 0 : index
    %8 = vector.load %arg9[%c0_6, %c0_7] : memref<256x128xf32, #tpu.memory_space<vmem>>, vector<256x128xf32>
    tpu.vector_store %arg9[%c0_6, %c0_7], %7 {strides = array<i32>} : memref<256x128xf32, #tpu.memory_space<vmem>>, vector<256x128xf32>,
    %9 = arith.truncf %7 : vector<256x128xf32> to vector<256x128xbf16>
    %c0_8 = arith.constant 0 : index
    %c0_9 = arith.constant 0 : index
    %10 = vector.load %arg4[%c0_8, %c0_9] : memref<128x128xbf16, #tpu.memory_space<vmem>>, vector<128x128xbf16>
    %cst_10 = arith.constant dense<0.000000e+00> : vector<256x128xf32>
    %11 = tpu.matmul %9, %10, %cst_10 {dimension_numbers = #tpu.dot_dimension_numbers<[1], [0], [0], [1], [0, 0, 1, 1], [], []>} : vector<256x128xbf16>, vector<128x128xbf16>, vector<256x128xf32> -> vector<256x128xf32>
    %c0_11 = arith.constant 0 : index
    %c0_12 = arith.constant 0 : index
    %12 = vector.load %arg5[%c0_11, %c0_12] : memref<1x128xf32, #tpu.memory_space<vmem>>, vector<1x128xf32>
    %13 = vector.broadcast %12 : vector<1x128xf32> to vector<256x128xf32>
    %14 = arith.addf %11, %13 : vector<256x128xf32>
    %cst_13 = arith.constant 0.000000e+00 : f32
    %15 = vector.broadcast %cst_13 : f32 to vector<256x128xf32>
    %16 = arith.maximumf %14, %15 : vector<256x128xf32>
    %17 = arith.truncf %16 : vector<256x128xf32> to vector<256x128xbf16>
    %c0_14 = arith.constant 0 : index
    %c0_15 = arith.constant 0 : index
    %18 = vector.load %arg6[%c0_14, %c0_15] : memref<128x128xbf16, #tpu.memory_space<vmem>>, vector<128x128xbf16>
    %cst_16 = arith.constant dense<0.000000e+00> : vector<256x128xf32>
    %19 = tpu.matmul %17, %18, %cst_16 {dimension_numbers = #tpu.dot_dimension_numbers<[1], [0], [0], [1], [0, 0, 1, 1], [], []>} : vector<256x128xbf16>, vector<128x128xbf16>, vector<256x128xf32> -> vector<256x128xf32>
    %c0_17 = arith.constant 0 : index
    %c0_18 = arith.constant 0 : index
    %20 = vector.load %arg7[%c0_17, %c0_18] : memref<1x128xf32, #tpu.memory_space<vmem>>, vector<1x128xf32>
    %21 = vector.broadcast %20 : vector<1x128xf32> to vector<256x128xf32>
    %22 = arith.addf %19, %21 : vector<256x128xf32>
    %23 = arith.negf %22 : vector<256x128xf32>
    %24 = math.exp %23 : vector<256x128xf32>
    %cst_19 = arith.constant 1.000000e+00 : f32
    %25 = vector.broadcast %cst_19 : f32 to vector<256x128xf32>
    %26 = arith.addf %25, %24 : vector<256x128xf32>
    %27 = arith.divf %25, %26 : vector<256x128xf32>
    %c0_20 = arith.constant 0 : index
    %c0_21 = arith.constant 0 : index
    %28 = vector.load %arg8[%c0_20, %c0_21] : memref<256x128xf32, #tpu.memory_space<vmem>>, vector<256x128xf32>
    tpu.vector_store %arg8[%c0_20, %c0_21], %27 {strides = array<i32>} : memref<256x128xf32, #tpu.memory_space<vmem>>, vector<256x128xf32>,
    return
  }
  func.func @transform_0(%arg0: i32) -> (i32, i32) {
    %c0_i32 = arith.constant 0 : i32
    %c0_i32_0 = arith.constant 0 : i32
    return %arg0, %c0_i32 : i32, i32
  }
  func.func @transform_1(%arg0: i32) -> (i32, i32) {
    %c0_i32 = arith.constant 0 : i32
    %c0_i32_0 = arith.constant 0 : i32
    %c0_i32_1 = arith.constant 0 : i32
    return %c0_i32, %c0_i32_0 : i32, i32
  }
  func.func @transform_2(%arg0: i32) -> (i32, i32) {
    %c0_i32 = arith.constant 0 : i32
    %c0_i32_0 = arith.constant 0 : i32
    %c0_i32_1 = arith.constant 0 : i32
    return %c0_i32, %c0_i32_0 : i32, i32
  }
  func.func @transform_3(%arg0: i32) -> (i32, i32) {
    %c0_i32 = arith.constant 0 : i32
    %c0_i32_0 = arith.constant 0 : i32
    %c0_i32_1 = arith.constant 0 : i32
    return %c0_i32, %c0_i32_0 : i32, i32
  }
  func.func @transform_4(%arg0: i32) -> (i32, i32) {
    %c0_i32 = arith.constant 0 : i32
    %c0_i32_0 = arith.constant 0 : i32
    %c0_i32_1 = arith.constant 0 : i32
    return %c0_i32, %c0_i32_0 : i32, i32
  }
  func.func @transform_5(%arg0: i32) -> (i32, i32) {
    %c0_i32 = arith.constant 0 : i32
    %c0_i32_0 = arith.constant 0 : i32
    %c0_i32_1 = arith.constant 0 : i32
    return %c0_i32, %c0_i32_0 : i32, i32
  }
  func.func @transform_6(%arg0: i32) -> (i32, i32) {
    %c0_i32 = arith.constant 0 : i32
    %c0_i32_0 = arith.constant 0 : i32
    %c0_i32_1 = arith.constant 0 : i32
    return %c0_i32, %c0_i32_0 : i32, i32
  }
  func.func @transform_7(%arg0: i32) -> (i32, i32) {
    %c0_i32 = arith.constant 0 : i32
    %c0_i32_0 = arith.constant 0 : i32
    return %arg0, %c0_i32 : i32, i32
  }
  func.func @transform_8(%arg0: i32) -> (i32, i32) {
    %c0_i32 = arith.constant 0 : i32
    %c0_i32_0 = arith.constant 0 : i32
    return %arg0, %c0_i32 : i32, i32
  }
}

</mosaic_0001>

<llo_original>
// kernel: fc_forward.1
$region0: #{fc_forward.1}
  #allocation0 [shape = 'u32[]', space=smem, size = 0x4, offset = 0x4, fixed_abs, tag = 'smem constant byte address 0x4 - core index']
  #allocation1 [shape = 'u32[144,128]{1,0:T(1,128)}', space=vmem, size = 0x12000, scoped, tag = 'internal scratch']
  %s0 = inlined_call_operand.vmem [shape: bf16[1024,128], index: 0, kind: input, shape index: {}]
  %s1 = inlined_call_operand.vmem [shape: bf16[128,128], index: 1, kind: input, shape index: {}]
  %s2 = inlined_call_operand.vmem [shape: f32[1,128], index: 2, kind: input, shape index: {}]
  %s3 = inlined_call_operand.vmem [shape: bf16[128,128], index: 3, kind: input, shape index: {}]
  %s4 = inlined_call_operand.vmem [shape: f32[1,128], index: 4, kind: input, shape index: {}]
  %s5 = inlined_call_operand.vmem [shape: bf16[128,128], index: 5, kind: input, shape index: {}]
  %s6 = inlined_call_operand.vmem [shape: f32[1,128], index: 6, kind: input, shape index: {}]
  %s7 = inlined_call_operand.vmem [shape: f32[1024,128], index: 7, kind: output, shape index: {0}]
  %s8 = inlined_call_operand.vmem [shape: f32[1024,128], index: 8, kind: output, shape index: {1}]
  %9 = xla_tuple %s7, %s8
  %s10 = sld [smem:[#allocation0]]
  $region69: #{fc_forward.1} parent=0
    _
  %s12 = ssub.s32 1, %s10
  %s13 = scalar_select 0, %s12, %s10
  loop: start=0, step=1, limit=6
  $region2: #{fc_forward.1} parent=0 // loop_pre_header
    _
  $region3: #{fc_forward.1} parent=0 // loop_header
    %s15 = sphi 0, %s19
    %p16 = scmp.ge.s32.totalorder %s15, 6
    %s25 = sphi 0, %s27
    %s28 = sphi 0, %s25
    %s29 = sphi 0, %s28
    %s45 = sphi 0, %s29
    %s49 = sphi 0, %s49
    %s51 = sphi 0, %s49
    %s52 = sphi 0, %s51
    %s66 = sphi 0, %s52
    %s70 = sphi 0, %s70
    %s72 = sphi 0, %s70
    %s73 = sphi 0, %s72
    %s87 = sphi 0, %s73
    %s91 = sphi 0, %s91
    %s93 = sphi 0, %s91
    %s94 = sphi 0, %s93
    %s108 = sphi 0, %s94
    %s112 = sphi 0, %s112
    %s114 = sphi 0, %s112
    %s115 = sphi 0, %s114
    %s129 = sphi 0, %s115
    %s133 = sphi 0, %s133
    %s135 = sphi 0, %s133
    %s136 = sphi 0, %s135
    %s150 = sphi 0, %s136
    %s154 = sphi 0, %s154
    %s156 = sphi 0, %s154
    %s157 = sphi 0, %s156
    %s171 = sphi 0, %s157
    %s177 = sphi 0, %s179
    %s180 = sphi 0, %s177
    %s181 = sphi 0, %s180
    %s197 = sphi 0, %s181
    %s203 = sphi 0, %s205
    %s206 = sphi 0, %s203
    %s207 = sphi 0, %s206
    %s223 = sphi 0, %s207
  $region4: #{fc_forward.1} parent=0 // loop_header_branch
    %18 = sbr.rel (%p16) target = $region8
  $region5: #{fc_forward.1} parent=0 // loop_body
    %s20 = ssub.s32 %s15, 1
    %s21 = ssub.s32 %s15, 2
    %s22 = sadd.s32 %s15, 1
    %s23 = ssub.s32 %s15, %s22
    %p24 = scmp.eq.s32.totalorder %s23, 0
    %s26 = sadd.s32 %s25, 1
    %s27 = scalar_select %p24, %s25, %s26
    %p30 = pneg %p24
    %p31 = scmp.eq.s32.totalorder %s15, 3
    %p32 = por %p30, %p31
    %p33 = scmp.ne.s32.totalorder %s25, %s28
    %p34 = scmp.eq.s32.totalorder %s15, 0
    %p35 = por %p33, %p34
    %p36 = scmp.ne.s32.totalorder %s25, %s28
    %p37 = scmp.eq.s32.totalorder %s20, 3
    %p38 = por %p36, %p37
    %p39 = scmp.ne.s32.totalorder %s28, %s29
    %p40 = scmp.eq.s32.totalorder %s20, 0
    %p41 = por %p39, %p40
    %p42 = scmp.ne.s32.totalorder %s28, %s29
    %p43 = scmp.eq.s32.totalorder %s21, 3
    %p44 = por %p42, %p43
    %p46 = scmp.ne.s32.totalorder %s29, %s45
    %p47 = scmp.eq.s32.totalorder %s21, 0
    %p48 = por %p46, %p47
    %s50 = sadd.s32 %s49, 1
    %p53 = scmp.eq.s32.totalorder %s15, 3
    %p54 = scmp.ne.s32.totalorder %s49, %s51
    %p55 = scmp.eq.s32.totalorder %s15, 0
    %p56 = por %p54, %p55
    %p57 = scmp.ne.s32.totalorder %s49, %s51
    %p58 = scmp.eq.s32.totalorder %s20, 3
    %p59 = por %p57, %p58
    %p60 = scmp.ne.s32.totalorder %s51, %s52
    %p61 = scmp.eq.s32.totalorder %s20, 0
    %p62 = por %p60, %p61
    %p63 = scmp.ne.s32.totalorder %s51, %s52
    %p64 = scmp.eq.s32.totalorder %s21, 3
    %p65 = por %p63, %p64
    %p67 = scmp.ne.s32.totalorder %s52, %s66
    %p68 = scmp.eq.s32.totalorder %s21, 0
    %p69 = por %p67, %p68
    %s71 = sadd.s32 %s70, 1
    %p74 = scmp.eq.s32.totalorder %s15, 3
    %p75 = scmp.ne.s32.totalorder %s70, %s72
    %p76 = scmp.eq.s32.totalorder %s15, 0
    %p77 = por %p75, %p76
    %p78 = scmp.ne.s32.totalorder %s70, %s72
    %p79 = scmp.eq.s32.totalorder %s20, 3
    %p80 = por %p78, %p79
    %p81 = scmp.ne.s32.totalorder %s72, %s73
    %p82 = scmp.eq.s32.totalorder %s20, 0
    %p83 = por %p81, %p82
    %p84 = scmp.ne.s32.totalorder %s72, %s73
    %p85 = scmp.eq.s32.totalorder %s21, 3
    %p86 = por %p84, %p85
    %p88 = scmp.ne.s32.totalorder %s73, %s87
    %p89 = scmp.eq.s32.totalorder %s21, 0
    %p90 = por %p88, %p89
    %s92 = sadd.s32 %s91, 1
    %p95 = scmp.eq.s32.totalorder %s15, 3
    %p96 = scmp.ne.s32.totalorder %s91, %s93
    %p97 = scmp.eq.s32.totalorder %s15, 0
    %p98 = por %p96, %p97
    %p99 = scmp.ne.s32.totalorder %s91, %s93
    %p100 = scmp.eq.s32.totalorder %s20, 3
    %p101 = por %p99, %p100
    %p102 = scmp.ne.s32.totalorder %s93, %s94
    %p103 = scmp.eq.s32.totalorder %s20, 0
    %p104 = por %p102, %p103
    %p105 = scmp.ne.s32.totalorder %s93, %s94
    %p106 = scmp.eq.s32.totalorder %s21, 3
    %p107 = por %p105, %p106
    %p109 = scmp.ne.s32.totalorder %s94, %s108
    %p110 = scmp.eq.s32.totalorder %s21, 0
    %p111 = por %p109, %p110
    %s113 = sadd.s32 %s112, 1
    %p116 = scmp.eq.s32.totalorder %s15, 3
    %p117 = scmp.ne.s32.totalorder %s112, %s114
    %p118 = scmp.eq.s32.totalorder %s15, 0
    %p119 = por %p117, %p118
    %p120 = scmp.ne.s32.totalorder %s112, %s114
    %p121 = scmp.eq.s32.totalorder %s20, 3
    %p122 = por %p120, %p121
    %p123 = scmp.ne.s32.totalorder %s114, %s115
    %p124 = scmp.eq.s32.totalorder %s20, 0
    %p125 = por %p123, %p124
    %p126 = scmp.ne.s32.totalorder %s114, %s115
    %p127 = scmp.eq.s32.totalorder %s21, 3
    %p128 = por %p126, %p127
    %p130 = scmp.ne.s32.totalorder %s115, %s129
    %p131 = scmp.eq.s32.totalorder %s21, 0
    %p132 = por %p130, %p131
    %s134 = sadd.s32 %s133, 1
    %p137 = scmp.eq.s32.totalorder %s15, 3
    %p138 = scmp.ne.s32.totalorder %s133, %s135
    %p139 = scmp.eq.s32.totalorder %s15, 0
    %p140 = por %p138, %p139
    %p141 = scmp.ne.s32.totalorder %s133, %s135
    %p142 = scmp.eq.s32.totalorder %s20, 3
    %p143 = por %p141, %p142
    %p144 = scmp.ne.s32.totalorder %s135, %s136
    %p145 = scmp.eq.s32.totalorder %s20, 0
    %p146 = por %p144, %p145
    %p147 = scmp.ne.s32.totalorder %s135, %s136
    %p148 = scmp.eq.s32.totalorder %s21, 3
    %p149 = por %p147, %p148
    %p151 = scmp.ne.s32.totalorder %s136, %s150
    %p152 = scmp.eq.s32.totalorder %s21, 0
    %p153 = por %p151, %p152
    %s155 = sadd.s32 %s154, 1
    %p158 = scmp.eq.s32.totalorder %s15, 3
    %p159 = scmp.ne.s32.totalorder %s154, %s156
    %p160 = scmp.eq.s32.totalorder %s15, 0
    %p161 = por %p159, %p160
    %p162 = scmp.ne.s32.totalorder %s154, %s156
    %p163 = scmp.eq.s32.totalorder %s20, 3
    %p164 = por %p162, %p163
    %p165 = scmp.ne.s32.totalorder %s156, %s157
    %p166 = scmp.eq.s32.totalorder %s20, 0
    %p167 = por %p165, %p166
    %p168 = scmp.ne.s32.totalorder %s156, %s157
    %p169 = scmp.eq.s32.totalorder %s21, 3
    %p170 = por %p168, %p169
    %p172 = scmp.ne.s32.totalorder %s157, %s171
    %p173 = scmp.eq.s32.totalorder %s21, 0
    %p174 = por %p172, %p173
    %s175 = ssub.s32 %s15, %s22
    %p176 = scmp.eq.s32.totalorder %s175, 0
    %s178 = sadd.s32 %s177, 1
    %s179 = scalar_select %p176, %s177, %s178
    %p182 = pneg %p176
    %p183 = scmp.eq.s32.totalorder %s15, 3
    %p184 = por %p182, %p183
    %p185 = scmp.ne.s32.totalorder %s177, %s180
    %p186 = scmp.eq.s32.totalorder %s15, 0
    %p187 = por %p185, %p186
    %p188 = scmp.ne.s32.totalorder %s177, %s180
    %p189 = scmp.eq.s32.totalorder %s20, 3
    %p190 = por %p188, %p189
    %p191 = scmp.ne.s32.totalorder %s180, %s181
    %p192 = scmp.eq.s32.totalorder %s20, 0
    %p193 = por %p191, %p192
    %p194 = scmp.ne.s32.totalorder %s180, %s181
    %p195 = scmp.eq.s32.totalorder %s21, 3
    %p196 = por %p194, %p195
    %p198 = scmp.ne.s32.totalorder %s181, %s197
    %p199 = scmp.eq.s32.totalorder %s21, 0
    %p200 = por %p198, %p199
    %s201 = ssub.s32 %s15, %s22
    %p202 = scmp.eq.s32.totalorder %s201, 0
    %s204 = sadd.s32 %s203, 1
    %s205 = scalar_select %p202, %s203, %s204
    %p208 = pneg %p202
    %p209 = scmp.eq.s32.totalorder %s15, 3
    %p210 = por %p208, %p209
    %p211 = scmp.ne.s32.totalorder %s203, %s206
    %p212 = scmp.eq.s32.totalorder %s15, 0
    %p213 = por %p211, %p212
    %p214 = scmp.ne.s32.totalorder %s203, %s206
    %p215 = scmp.eq.s32.totalorder %s20, 3
    %p216 = por %p214, %p215
    %p217 = scmp.ne.s32.totalorder %s206, %s207
    %p218 = scmp.eq.s32.totalorder %s20, 0
    %p219 = por %p217, %p218
    %p220 = scmp.ne.s32.totalorder %s206, %s207
    %p221 = scmp.eq.s32.totalorder %s21, 3
    %p222 = por %p220, %p221
    %p224 = scmp.ne.s32.totalorder %s207, %s223
    %p225 = scmp.eq.s32.totalorder %s21, 0
    %p226 = por %p224, %p225
    %p227 = scmp.le.s32.totalorder 1, %s15
    %p228 = scmp.lt.s32.totalorder %s15, 5
    %p229 = pnand %p227, %p228
    %p230 = pneg %p229
    // Predicated region
    $region9: #{fc_forward.1} parent=5 // pred_check
      _
    $region10: #{fc_forward.1} parent=5 // pred_check_branch
      %232 = sbr.rel (%p229) target = $region12
    $region11: #{fc_forward.1} parent=5 // pred_region
      %s233 = ssub.s32 %s15, 1
      // Predicated region
      $region13: #{fc_forward.1} parent=11 // pred_check
        %p234 = pneg %p62
      $region14: #{fc_forward.1} parent=11 // pred_check_branch
        %236 = sbr.rel (%p234) target = $region16
      $region15: #{fc_forward.1} parent=11 // pred_region
        _
      $region16: #{fc_forward.1} parent=11 // pred_fallthru
        _
      // Predicated region
      $region17: #{fc_forward.1} parent=11 // pred_check
        %p237 = pneg %p83
      $region18: #{fc_forward.1} parent=11 // pred_check_branch
        %239 = sbr.rel (%p237) target = $region20
      $region19: #{fc_forward.1} parent=11 // pred_region
        _
      $region20: #{fc_forward.1} parent=11 // pred_fallthru
        _
      // Predicated region
      $region21: #{fc_forward.1} parent=11 // pred_check
        %p240 = pneg %p104
      $region22: #{fc_forward.1} parent=11 // pred_check_branch
        %242 = sbr.rel (%p240) target = $region24
      $region23: #{fc_forward.1} parent=11 // pred_region
        _
      $region24: #{fc_forward.1} parent=11 // pred_fallthru
        _
      // Predicated region
      $region25: #{fc_forward.1} parent=11 // pred_check
        %p243 = pneg %p125
      $region26: #{fc_forward.1} parent=11 // pred_check_branch
        %245 = sbr.rel (%p243) target = $region28
      $region27: #{fc_forward.1} parent=11 // pred_region
        _
      $region28: #{fc_forward.1} parent=11 // pred_fallthru
        _
      // Predicated region
      $region29: #{fc_forward.1} parent=11 // pred_check
        %p246 = pneg %p146
      $region30: #{fc_forward.1} parent=11 // pred_check_branch
        %248 = sbr.rel (%p246) target = $region32
      $region31: #{fc_forward.1} parent=11 // pred_region
        _
      $region32: #{fc_forward.1} parent=11 // pred_fallthru
        _
      // Predicated region
      $region33: #{fc_forward.1} parent=11 // pred_check
        %p249 = pneg %p167
      $region34: #{fc_forward.1} parent=11 // pred_check_branch
        %251 = sbr.rel (%p249) target = $region36
      $region35: #{fc_forward.1} parent=11 // pred_region
        _
      $region36: #{fc_forward.1} parent=11 // pred_fallthru
        _
    $region12: #{fc_forward.1} parent=5 // pred_fallthru
      _
    %p252 = scmp.lt.s32.totalorder %s15, 4
    // Predicated region
    $region37: #{fc_forward.1} parent=5 // pred_check
      %p253 = pneg %p252
    $region38: #{fc_forward.1} parent=5 // pred_check_branch
      %255 = sbr.rel (%p253) target = $region40
    $region39: #{fc_forward.1} parent=5 // pred_region
      // Predicated region
      $region41: #{fc_forward.1} parent=39 // pred_check
        %p256 = pneg %p35
      $region42: #{fc_forward.1} parent=39 // pred_check_branch
        %258 = sbr.rel (%p256) target = $region44
      $region43: #{fc_forward.1} parent=39 // pred_region
        %s259 = smul.u32 32, %s15
        %p260 = scmp.lt.s32.totalorder %s259, 127
        %s261 = scalar_select %p260, %s259, 127
        %s262 = smul.addr %s261, 4
        %s263 = scalar_lea.vmem %s0, %s262
        %s264 = smul.u32 32, %s15
      $region44: #{fc_forward.1} parent=39 // pred_fallthru
        _
    $region40: #{fc_forward.1} parent=5 // pred_fallthru
      _
    %p265 = scmp.le.s32.totalorder 1, %s15
    %p266 = scmp.lt.s32.totalorder %s15, 5
    %p267 = pnand %p265, %p266
    %p268 = pneg %p267
    // Predicated region
    $region45: #{fc_forward.1} parent=5 // pred_check
      _
    $region46: #{fc_forward.1} parent=5 // pred_check_branch
      %270 = sbr.rel (%p267) target = $region48
    $region47: #{fc_forward.1} parent=5 // pred_region
      %s271 = ssub.s32 %s15, 1
      %s272 = smul.u32 32, %s20
      %p273 = scmp.lt.s32.totalorder %s272, 127
      %s274 = scalar_select %p273, %s272, 127
      %s275 = smul.addr %s274, 4
      %s276 = scalar_lea.vmem %s0, %s275
      %p277 = pneg %p41
      %p278 = pneg %p38
      %p279 = pneg %p62
      %p280 = pneg %p59
      %p281 = pneg %p83
      %p282 = pneg %p80
      %p283 = pneg %p104
      %p284 = pneg %p101
      %p285 = pneg %p125
      %p286 = pneg %p122
      %p287 = pneg %p146
      %p288 = pneg %p143
      %p289 = pneg %p167
      %p290 = pneg %p164
      %p291 = pneg %p193
      %p292 = pneg %p190
      %s293 = smul.u32 32, %s20
      %p294 = scmp.lt.s32.totalorder %s293, 127
      %s295 = scalar_select %p294, %s293, 127
      %s296 = smul.addr %s295, 8
      %s297 = scalar_lea.vmem %s7, %s296
      %p298 = pneg %p219
      %p299 = pneg %p216
      %s300 = smul.u32 32, %s20
      %p301 = scmp.lt.s32.totalorder %s300, 127
      %s302 = scalar_select %p301, %s300, 127
      %s303 = smul.addr %s302, 8
      %s304 = scalar_lea.vmem %s8, %s303
      %s305 = smul.u32 32, %s20
      %p306 = scmp.lt.s32.totalorder %s305, 127
      %s307 = scalar_select %p306, %s305, 127
      %s308 = smul.addr %s307, 4
      %s309 = scalar_lea.vmem %s0, %s308
      %s310 = smul.u32 32, %s20
      %s311 = smul.u32 32, %s20
      %p312 = scmp.lt.s32.totalorder %s311, 127
      %s313 = scalar_select %p312, %s311, 127
      %s314 = smul.addr %s313, 8
      %s315 = scalar_lea.vmem %s7, %s314
      %s316 = smul.u32 32, %s20
      %s317 = smul.u32 32, %s20
      %p318 = scmp.lt.s32.totalorder %s317, 127
      %s319 = scalar_select %p318, %s317, 127
      %s320 = smul.addr %s319, 8
      %s321 = scalar_lea.vmem %s8, %s320
      %s322 = smul.u32 32, %s20
      %v324 = vld [vmem:[%s309] sm:$0xf]
      %v325 = vld [vmem:[%s309 + $0x4] sm:$0xf]
      %v326 = vld [vmem:[%s309 + $0x8] sm:$0xf]
      %v327 = vld [vmem:[%s309 + $0xc] sm:$0xf]
      %v328 = vld [vmem:[%s309 + $0x10] sm:$0xf]
      %v329 = vld [vmem:[%s309 + $0x14] sm:$0xf]
      %v330 = vld [vmem:[%s309 + $0x18] sm:$0xf]
      %v331 = vld [vmem:[%s309 + $0x1c] sm:$0xf]
      %v332 = vld [vmem:[%s309 + $0x20] sm:$0xf]
      %v333 = vld [vmem:[%s309 + $0x24] sm:$0xf]
      %v334 = vld [vmem:[%s309 + $0x28] sm:$0xf]
      %v335 = vld [vmem:[%s309 + $0x2c] sm:$0xf]
      %v336 = vld [vmem:[%s309 + $0x30] sm:$0xf]
      %v337 = vld [vmem:[%s309 + $0x34] sm:$0xf]
      %v338 = vld [vmem:[%s309 + $0x38] sm:$0xf]
      %v339 = vld [vmem:[%s309 + $0x3c] sm:$0xf]
      %v340 = vld [vmem:[%s309 + $0x40] sm:$0xf]
      %v341 = vld [vmem:[%s309 + $0x44] sm:$0xf]
      %v342 = vld [vmem:[%s309 + $0x48] sm:$0xf]
      %v343 = vld [vmem:[%s309 + $0x4c] sm:$0xf]
      %v344 = vld [vmem:[%s309 + $0x50] sm:$0xf]
      %v345 = vld [vmem:[%s309 + $0x54] sm:$0xf]
      %v346 = vld [vmem:[%s309 + $0x58] sm:$0xf]
      %v347 = vld [vmem:[%s309 + $0x5c] sm:$0xf]
      %v348 = vld [vmem:[%s309 + $0x60] sm:$0xf]
      %v349 = vld [vmem:[%s309 + $0x64] sm:$0xf]
      %v350 = vld [vmem:[%s309 + $0x68] sm:$0xf]
      %v351 = vld [vmem:[%s309 + $0x6c] sm:$0xf]
      %v352 = vld [vmem:[%s309 + $0x70] sm:$0xf]
      %v353 = vld [vmem:[%s309 + $0x74] sm:$0xf]
      %v354 = vld [vmem:[%s309 + $0x78] sm:$0xf]
      %v355 = vld [vmem:[%s309 + $0x7c] sm:$0xf]
      %v356 = vld [vmem:[%s1] sm:$0xf]
      %v357 = vld [vmem:[%s1 + $0x4] sm:$0xf]
      %v358 = vld [vmem:[%s1 + $0x8] sm:$0xf]
      %v359 = vld [vmem:[%s1 + $0xc] sm:$0xf]
      %v360 = vld [vmem:[%s1 + $0x10] sm:$0xf]
      %v361 = vld [vmem:[%s1 + $0x14] sm:$0xf]
      %v362 = vld [vmem:[%s1 + $0x18] sm:$0xf]
      %v363 = vld [vmem:[%s1 + $0x1c] sm:$0xf]
      %v364 = vld [vmem:[%s1 + $0x20] sm:$0xf]
      %v365 = vld [vmem:[%s1 + $0x24] sm:$0xf]
      %v366 = vld [vmem:[%s1 + $0x28] sm:$0xf]
      %v367 = vld [vmem:[%s1 + $0x2c] sm:$0xf]
      %v368 = vld [vmem:[%s1 + $0x30] sm:$0xf]
      %v369 = vld [vmem:[%s1 + $0x34] sm:$0xf]
      %v370 = vld [vmem:[%s1 + $0x38] sm:$0xf]
      %v371 = vld [vmem:[%s1 + $0x3c] sm:$0xf]
      %v372 = vld [vmem:[%s2] sm:$0x1]
      %v374 = vlaneseq
      %v375 = vshrl.u32 %v374, 7
      %v376 = vsub.s32 0, %v375
      %v377 = vrot.slane %v372, %v376
      %v411 = vunpack.c.l.b16 %v324
      %v412 = vunpack.c.l.b16 %v325
      %v413 = vunpack.c.l.b16 %v326
      %v414 = vunpack.c.l.b16 %v327
      %v415 = vunpack.c.l.b16 %v328
      %v416 = vunpack.c.l.b16 %v329
      %v417 = vunpack.c.l.b16 %v330
      %v418 = vunpack.c.l.b16 %v331
      %v419 = vunpack.c.l.b16 %v332
      %v420 = vunpack.c.l.b16 %v333
      %v421 = vunpack.c.l.b16 %v334
      %v422 = vunpack.c.l.b16 %v335
      %v423 = vunpack.c.l.b16 %v336
      %v424 = vunpack.c.l.b16 %v337
      %v425 = vunpack.c.l.b16 %v338
      %v426 = vunpack.c.l.b16 %v339
      %v427 = vunpack.c.l.b16 %v340
      %v428 = vunpack.c.l.b16 %v341
      %v429 = vunpack.c.l.b16 %v342
      %v430 = vunpack.c.l.b16 %v343
      %v431 = vunpack.c.l.b16 %v344
      %v432 = vunpack.c.l.b16 %v345
      %v433 = vunpack.c.l.b16 %v346
      %v434 = vunpack.c.l.b16 %v347
      %v435 = vunpack.c.l.b16 %v348
      %v436 = vunpack.c.l.b16 %v349
      %v437 = vunpack.c.l.b16 %v350
      %v438 = vunpack.c.l.b16 %v351
      %v439 = vunpack.c.l.b16 %v352
      %v440 = vunpack.c.l.b16 %v353
      %v441 = vunpack.c.l.b16 %v354
      %v442 = vunpack.c.l.b16 %v355
      %v443 = vpack.c.b16 %v412, %v411
      %v444 = vpack.c.b16 %v414, %v413
      %v445 = vpack.c.b16 %v416, %v415
      %v446 = vpack.c.b16 %v418, %v417
      %v447 = vpack.c.b16 %v420, %v419
      %v448 = vpack.c.b16 %v422, %v421
      %v449 = vpack.c.b16 %v424, %v423
      %v450 = vpack.c.b16 %v426, %v425
      %v451 = vpack.c.b16 %v428, %v427
      %v452 = vpack.c.b16 %v430, %v429
      %v453 = vpack.c.b16 %v432, %v431
      %v454 = vpack.c.b16 %v434, %v433
      %v455 = vpack.c.b16 %v436, %v435
      %v456 = vpack.c.b16 %v438, %v437
      %v457 = vpack.c.b16 %v440, %v439
      %v458 = vpack.c.b16 %v442, %v441
      %v491 = vunpack.c.l.b16 %v356
      %v492 = vunpack.c.l.b16 %v357
      %v493 = vunpack.c.l.b16 %v358
      %v494 = vunpack.c.l.b16 %v359
      %v495 = vunpack.c.l.b16 %v360
      %v496 = vunpack.c.l.b16 %v361
      %v497 = vunpack.c.l.b16 %v362
      %v498 = vunpack.c.l.b16 %v363
      %v499 = vunpack.c.l.b16 %v364
      %v500 = vunpack.c.l.b16 %v365
      %v501 = vunpack.c.l.b16 %v366
      %v502 = vunpack.c.l.b16 %v367
      %v503 = vunpack.c.l.b16 %v368
      %v504 = vunpack.c.l.b16 %v369
      %v505 = vunpack.c.l.b16 %v370
      %v506 = vunpack.c.l.b16 %v371
      %v507 = vpack.c.b16 %v492, %v491
      %v508 = vpack.c.b16 %v494, %v493
      %v509 = vpack.c.b16 %v496, %v495
      %v510 = vpack.c.b16 %v498, %v497
      %v511 = vpack.c.b16 %v500, %v499
      %v512 = vpack.c.b16 %v502, %v501
      %v513 = vpack.c.b16 %v504, %v503
      %v514 = vpack.c.b16 %v506, %v505
      %523 = vmatprep.subr.bf16.mxu0 0
      %524 = vmatpush1.bf16.msra.mxu0 %v514
      %525 = vmatprep.subr.bf16.mxu0 0
      %526 = vmatpush1.bf16.msra.mxu0 %v513
      %527 = vmatprep.subr.bf16.mxu0 0
      %528 = vmatpush1.bf16.msra.mxu0 %v512
      %529 = vmatprep.subr.bf16.mxu0 0
      %530 = vmatpush1.bf16.msra.mxu0 %v511
      %531 = vmatprep.subr.bf16.mxu0 0
      %532 = vmatpush1.bf16.msra.mxu0 %v510
      %533 = vmatprep.subr.bf16.mxu0 0
      %534 = vmatpush1.bf16.msra.mxu0 %v509
      %535 = vmatprep.subr.bf16.mxu0 0
      %536 = vmatpush1.bf16.msra.mxu0 %v508
      %537 = vmatprep.subr.bf16.mxu0 0
      %538 = vmatpush1.bf16.msra.mxu0 %v507
      %539 = vmatprep.subr.bf16.mxu0 0
      %540 = vmatpush2.bf16.msra.mxu0 0
      %541 = vmatprep.subr.bf16.mxu0 0
      %542 = vmatpush2.bf16.msra.mxu0 0
      %543 = vmatprep.subr.bf16.mxu0 0
      %544 = vmatpush2.bf16.msra.mxu0 0
      %545 = vmatprep.subr.bf16.mxu0 0
      %546 = vmatpush2.bf16.msra.mxu0 0
      %547 = vmatprep.subr.bf16.mxu0 0
      %548 = vmatpush2.bf16.msra.mxu0 0
      %549 = vmatprep.subr.bf16.mxu0 0
      %550 = vmatpush2.bf16.msra.mxu0 0
      %551 = vmatprep.subr.bf16.mxu0 0
      %552 = vmatpush2.bf16.msra.mxu0 0
      %553 = vmatprep.subr.bf16.mxu0 0
      %554 = vmatpush2.bf16.msra.mxu0 0
      %555 = vmatprep.mubr.bf16.mxu0 0
      %556 = vmatmul.mubr.bf16.gmra.mxu0 %v443
      %v557 = vpop.f32.mrf.mxu0
      %v558 = vadd.f32 %v377, %v557
      %v559 = vpop.f32.mrf.mxu0
      %v560 = vpop.f32.mrf.mxu0
      %v561 = vadd.f32 %v377, %v560
      %v562 = vpop.f32.mrf.mxu0
      %563 = vmatprep.mubr.bf16.mxu0 0
      %564 = vmatmul.mubr.bf16.gmra.mxu0 %v444
      %v565 = vpop.f32.mrf.mxu0
      %v566 = vadd.f32 %v377, %v565
      %v567 = vpop.f32.mrf.mxu0
      %v568 = vpop.f32.mrf.mxu0
      %v569 = vadd.f32 %v377, %v568
      %v570 = vpop.f32.mrf.mxu0
      %571 = vmatprep.mubr.bf16.mxu0 0
      %572 = vmatmul.mubr.bf16.gmra.mxu0 %v445
      %v573 = vpop.f32.mrf.mxu0
      %v574 = vadd.f32 %v377, %v573
      %v575 = vpop.f32.mrf.mxu0
      %v576 = vpop.f32.mrf.mxu0
      %v577 = vadd.f32 %v377, %v576
      %v578 = vpop.f32.mrf.mxu0
      %579 = vmatprep.mubr.bf16.mxu0 0
      %580 = vmatmul.mubr.bf16.gmra.mxu0 %v446
      %v581 = vpop.f32.mrf.mxu0
      %v582 = vadd.f32 %v377, %v581
      %v583 = vpop.f32.mrf.mxu0
      %v584 = vpop.f32.mrf.mxu0
      %v585 = vadd.f32 %v377, %v584
      %v586 = vpop.f32.mrf.mxu0
      %587 = vmatprep.mubr.bf16.mxu0 0
      %588 = vmatmul.mubr.bf16.gmra.mxu0 %v447
      %v589 = vpop.f32.mrf.mxu0
      %v590 = vadd.f32 %v377, %v589
      %v591 = vpop.f32.mrf.mxu0
      %v592 = vpop.f32.mrf.mxu0
      %v593 = vadd.f32 %v377, %v592
      %v594 = vpop.f32.mrf.mxu0
      %595 = vmatprep.mubr.bf16.mxu0 0
      %596 = vmatmul.mubr.bf16.gmra.mxu0 %v448
      %v597 = vpop.f32.mrf.mxu0
      %v598 = vadd.f32 %v377, %v597
      %v599 = vpop.f32.mrf.mxu0
      %v600 = vpop.f32.mrf.mxu0
      %v601 = vadd.f32 %v377, %v600
      %v602 = vpop.f32.mrf.mxu0
      %603 = vmatprep.mubr.bf16.mxu0 0
      %604 = vmatmul.mubr.bf16.gmra.mxu0 %v449
      %v605 = vpop.f32.mrf.mxu0
      %v606 = vadd.f32 %v377, %v605
      %v607 = vpop.f32.mrf.mxu0
      %v608 = vpop.f32.mrf.mxu0
      %v609 = vadd.f32 %v377, %v608
      %v610 = vpop.f32.mrf.mxu0
      %611 = vmatprep.mubr.bf16.mxu0 0
      %612 = vmatmul.mubr.bf16.gmra.mxu0 %v450
      %v613 = vpop.f32.mrf.mxu0
      %v614 = vadd.f32 %v377, %v613
      %v615 = vpop.f32.mrf.mxu0
      %v616 = vpop.f32.mrf.mxu0
      %v617 = vadd.f32 %v377, %v616
      %v618 = vpop.f32.mrf.mxu0
      %619 = vmatprep.mubr.bf16.mxu0 0
      %620 = vmatmul.mubr.bf16.gmra.mxu0 %v451
      %v621 = vpop.f32.mrf.mxu0
      %v622 = vadd.f32 %v377, %v621
      %v623 = vpop.f32.mrf.mxu0
      %v624 = vpop.f32.mrf.mxu0
      %v625 = vadd.f32 %v377, %v624
      %v626 = vpop.f32.mrf.mxu0
      %627 = vmatprep.mubr.bf16.mxu0 0
      %628 = vmatmul.mubr.bf16.gmra.mxu0 %v452
      %v629 = vpop.f32.mrf.mxu0
      %v630 = vadd.f32 %v377, %v629
      %v631 = vpop.f32.mrf.mxu0
      %v632 = vpop.f32.mrf.mxu0
      %v633 = vadd.f32 %v377, %v632
      %v634 = vpop.f32.mrf.mxu0
      %635 = vmatprep.mubr.bf16.mxu0 0
      %636 = vmatmul.mubr.bf16.gmra.mxu0 %v453
      %v637 = vpop.f32.mrf.mxu0
      %v638 = vadd.f32 %v377, %v637
      %v639 = vpop.f32.mrf.mxu0
      %v640 = vpop.f32.mrf.mxu0
      %v641 = vadd.f32 %v377, %v640
      %v642 = vpop.f32.mrf.mxu0
      %643 = vmatprep.mubr.bf16.mxu0 0
      %644 = vmatmul.mubr.bf16.gmra.mxu0 %v454
      %v645 = vpop.f32.mrf.mxu0
      %v646 = vadd.f32 %v377, %v645
      %v647 = vpop.f32.mrf.mxu0
      %v648 = vpop.f32.mrf.mxu0
      %v649 = vadd.f32 %v377, %v648
      %v650 = vpop.f32.mrf.mxu0
      %651 = vmatprep.mubr.bf16.mxu0 0
      %652 = vmatmul.mubr.bf16.gmra.mxu0 %v455
      %v653 = vpop.f32.mrf.mxu0
      %v654 = vadd.f32 %v377, %v653
      %v655 = vpop.f32.mrf.mxu0
      %v656 = vpop.f32.mrf.mxu0
      %v657 = vadd.f32 %v377, %v656
      %v658 = vpop.f32.mrf.mxu0
      %659 = vmatprep.mubr.bf16.mxu0 0
      %660 = vmatmul.mubr.bf16.gmra.mxu0 %v456
      %v661 = vpop.f32.mrf.mxu0
      %v662 = vadd.f32 %v377, %v661
      %v663 = vpop.f32.mrf.mxu0
      %v664 = vpop.f32.mrf.mxu0
      %v665 = vadd.f32 %v377, %v664
      %v666 = vpop.f32.mrf.mxu0
      %667 = vmatprep.mubr.bf16.mxu0 0
      %668 = vmatmul.mubr.bf16.gmra.mxu0 %v457
      %v669 = vpop.f32.mrf.mxu0
      %v670 = vadd.f32 %v377, %v669
      %v671 = vpop.f32.mrf.mxu0
      %v672 = vpop.f32.mrf.mxu0
      %v673 = vadd.f32 %v377, %v672
      %v674 = vpop.f32.mrf.mxu0
      %675 = vmatprep.mubr.bf16.mxu0 0
      %676 = vmatmul.mubr.bf16.gmra.mxu0 %v458
      %v677 = vpop.f32.mrf.mxu0
      %v678 = vadd.f32 %v377, %v677
      %v679 = vpop.f32.mrf.mxu0
      %v680 = vpop.f32.mrf.mxu0
      %v681 = vadd.f32 %v377, %v680
      %v682 = vpop.f32.mrf.mxu0
      %683 = vdwg.mxu0
      %v684 = vmax.f32 %v558, 0.0
      %v685 = vmax.f32 %v561, 0.0
      %v686 = vmax.f32 %v566, 0.0
      %v687 = vmax.f32 %v569, 0.0
      %v688 = vmax.f32 %v574, 0.0
      %v689 = vmax.f32 %v577, 0.0
      %v690 = vmax.f32 %v582, 0.0
      %v691 = vmax.f32 %v585, 0.0
      %v692 = vmax.f32 %v590, 0.0
      %v693 = vmax.f32 %v593, 0.0
      %v694 = vmax.f32 %v598, 0.0
      %v695 = vmax.f32 %v601, 0.0
      %v696 = vmax.f32 %v606, 0.0
      %v697 = vmax.f32 %v609, 0.0
      %v698 = vmax.f32 %v614, 0.0
      %v699 = vmax.f32 %v617, 0.0
      %v700 = vmax.f32 %v622, 0.0
      %v701 = vmax.f32 %v625, 0.0
      %v702 = vmax.f32 %v630, 0.0
      %v703 = vmax.f32 %v633, 0.0
      %v704 = vmax.f32 %v638, 0.0
      %v705 = vmax.f32 %v641, 0.0
      %v706 = vmax.f32 %v646, 0.0
      %v707 = vmax.f32 %v649, 0.0
      %v708 = vmax.f32 %v654, 0.0
      %v709 = vmax.f32 %v657, 0.0
      %v710 = vmax.f32 %v662, 0.0
      %v711 = vmax.f32 %v665, 0.0
      %v712 = vmax.f32 %v670, 0.0
      %v713 = vmax.f32 %v673, 0.0
      %v714 = vmax.f32 %v678, 0.0
      %v715 = vmax.f32 %v681, 0.0
      %716 = vst [vmem:[%s321] sm:$0xff] %v684
      %717 = vst [vmem:[%s321 + $0x8] sm:$0xff] %v685
      %718 = vst [vmem:[%s321 + $0x10] sm:$0xff] %v686
      %719 = vst [vmem:[%s321 + $0x18] sm:$0xff] %v687
      %720 = vst [vmem:[%s321 + $0x20] sm:$0xff] %v688
      %721 = vst [vmem:[%s321 + $0x28] sm:$0xff] %v689
      %722 = vst [vmem:[%s321 + $0x30] sm:$0xff] %v690
      %723 = vst [vmem:[%s321 + $0x38] sm:$0xff] %v691
      %724 = vst [vmem:[%s321 + $0x40] sm:$0xff] %v692
      %725 = vst [vmem:[%s321 + $0x48] sm:$0xff] %v693
      %726 = vst [vmem:[%s321 + $0x50] sm:$0xff] %v694
      %727 = vst [vmem:[%s321 + $0x58] sm:$0xff] %v695
      %728 = vst [vmem:[%s321 + $0x60] sm:$0xff] %v696
      %729 = vst [vmem:[%s321 + $0x68] sm:$0xff] %v697
      %730 = vst [vmem:[%s321 + $0x70] sm:$0xff] %v698
      %731 = vst [vmem:[%s321 + $0x78] sm:$0xff] %v699
      %732 = vst [vmem:[%s321 + $0x80] sm:$0xff] %v700
      %733 = vst [vmem:[%s321 + $0x88] sm:$0xff] %v701
      %734 = vst [vmem:[%s321 + $0x90] sm:$0xff] %v702
      %735 = vst [vmem:[%s321 + $0x98] sm:$0xff] %v703
      %736 = vst [vmem:[%s321 + $0xa0] sm:$0xff] %v704
      %737 = vst [vmem:[%s321 + $0xa8] sm:$0xff] %v705
      %738 = vst [vmem:[%s321 + $0xb0] sm:$0xff] %v706
      %739 = vst [vmem:[%s321 + $0xb8] sm:$0xff] %v707
      %740 = vst [vmem:[%s321 + $0xc0] sm:$0xff] %v708
      %741 = vst [vmem:[%s321 + $0xc8] sm:$0xff] %v709
      %742 = vst [vmem:[%s321 + $0xd0] sm:$0xff] %v710
      %743 = vst [vmem:[%s321 + $0xd8] sm:$0xff] %v711
      %744 = vst [vmem:[%s321 + $0xe0] sm:$0xff] %v712
      %745 = vst [vmem:[%s321 + $0xe8] sm:$0xff] %v713
      %746 = vst [vmem:[%s321 + $0xf0] sm:$0xff] %v714
      %747 = vst [vmem:[%s321 + $0xf8] sm:$0xff] %v715
      %v748 = vpack.c.bf16 %v685, %v684
      %v749 = vpack.c.bf16 %v687, %v686
      %v750 = vpack.c.bf16 %v689, %v688
      %v751 = vpack.c.bf16 %v691, %v690
      %v752 = vpack.c.bf16 %v693, %v692
      %v753 = vpack.c.bf16 %v695, %v694
      %v754 = vpack.c.bf16 %v697, %v696
      %v755 = vpack.c.bf16 %v699, %v698
      %v756 = vpack.c.bf16 %v701, %v700
      %v757 = vpack.c.bf16 %v703, %v702
      %v758 = vpack.c.bf16 %v705, %v704
      %v759 = vpack.c.bf16 %v707, %v706
      %v760 = vpack.c.bf16 %v709, %v708
      %v761 = vpack.c.bf16 %v711, %v710
      %v762 = vpack.c.bf16 %v713, %v712
      %v763 = vpack.c.bf16 %v715, %v714
      %v764 = vld [vmem:[%s3] sm:$0xf]
      %v765 = vld [vmem:[%s3 + $0x4] sm:$0xf]
      %v766 = vld [vmem:[%s3 + $0x8] sm:$0xf]
      %v767 = vld [vmem:[%s3 + $0xc] sm:$0xf]
      %v768 = vld [vmem:[%s3 + $0x10] sm:$0xf]
      %v769 = vld [vmem:[%s3 + $0x14] sm:$0xf]
      %v770 = vld [vmem:[%s3 + $0x18] sm:$0xf]
      %v771 = vld [vmem:[%s3 + $0x1c] sm:$0xf]
      %v772 = vld [vmem:[%s3 + $0x20] sm:$0xf]
      %v773 = vld [vmem:[%s3 + $0x24] sm:$0xf]
      %v774 = vld [vmem:[%s3 + $0x28] sm:$0xf]
      %v775 = vld [vmem:[%s3 + $0x2c] sm:$0xf]
      %v776 = vld [vmem:[%s3 + $0x30] sm:$0xf]
      %v777 = vld [vmem:[%s3 + $0x34] sm:$0xf]
      %v778 = vld [vmem:[%s3 + $0x38] sm:$0xf]
      %v779 = vld [vmem:[%s3 + $0x3c] sm:$0xf]
      %v780 = vld [vmem:[%s4] sm:$0x1]
      %v782 = vlaneseq
      %v783 = vshrl.u32 %v782, 7
      %v784 = vsub.s32 0, %v783
      %v785 = vrot.slane %v780, %v784
      %v803 = vunpack.c.l.b16 %v764
      %v804 = vunpack.c.l.b16 %v765
      %v805 = vunpack.c.l.b16 %v766
      %v806 = vunpack.c.l.b16 %v767
      %v807 = vunpack.c.l.b16 %v768
      %v808 = vunpack.c.l.b16 %v769
      %v809 = vunpack.c.l.b16 %v770
      %v810 = vunpack.c.l.b16 %v771
      %v811 = vunpack.c.l.b16 %v772
      %v812 = vunpack.c.l.b16 %v773
      %v813 = vunpack.c.l.b16 %v774
      %v814 = vunpack.c.l.b16 %v775
      %v815 = vunpack.c.l.b16 %v776
      %v816 = vunpack.c.l.b16 %v777
      %v817 = vunpack.c.l.b16 %v778
      %v818 = vunpack.c.l.b16 %v779
      %v819 = vpack.c.b16 %v804, %v803
      %v820 = vpack.c.b16 %v806, %v805
      %v821 = vpack.c.b16 %v808, %v807
      %v822 = vpack.c.b16 %v810, %v809
      %v823 = vpack.c.b16 %v812, %v811
      %v824 = vpack.c.b16 %v814, %v813
      %v825 = vpack.c.b16 %v816, %v815
      %v826 = vpack.c.b16 %v818, %v817
      %835 = vmatprep.subr.bf16.mxu0 0
      %836 = vmatpush1.bf16.msra.mxu0 %v826
      %837 = vmatprep.subr.bf16.mxu0 0
      %838 = vmatpush1.bf16.msra.mxu0 %v825
      %839 = vmatprep.subr.bf16.mxu0 0
      %840 = vmatpush1.bf16.msra.mxu0 %v824
      %841 = vmatprep.subr.bf16.mxu0 0
      %842 = vmatpush1.bf16.msra.mxu0 %v823
      %843 = vmatprep.subr.bf16.mxu0 0
      %844 = vmatpush1.bf16.msra.mxu0 %v822
      %845 = vmatprep.subr.bf16.mxu0 0
      %846 = vmatpush1.bf16.msra.mxu0 %v821
      %847 = vmatprep.subr.bf16.mxu0 0
      %848 = vmatpush1.bf16.msra.mxu0 %v820
      %849 = vmatprep.subr.bf16.mxu0 0
      %850 = vmatpush1.bf16.msra.mxu0 %v819
      %851 = vmatprep.subr.bf16.mxu0 0
      %852 = vmatpush2.bf16.msra.mxu0 0
      %853 = vmatprep.subr.bf16.mxu0 0
      %854 = vmatpush2.bf16.msra.mxu0 0
      %855 = vmatprep.subr.bf16.mxu0 0
      %856 = vmatpush2.bf16.msra.mxu0 0
      %857 = vmatprep.subr.bf16.mxu0 0
      %858 = vmatpush2.bf16.msra.mxu0 0
      %859 = vmatprep.subr.bf16.mxu0 0
      %860 = vmatpush2.bf16.msra.mxu0 0
      %861 = vmatprep.subr.bf16.mxu0 0
      %862 = vmatpush2.bf16.msra.mxu0 0
      %863 = vmatprep.subr.bf16.mxu0 0
      %864 = vmatpush2.bf16.msra.mxu0 0
      %865 = vmatprep.subr.bf16.mxu0 0
      %866 = vmatpush2.bf16.msra.mxu0 0
      %867 = vmatprep.mubr.bf16.mxu0 0
      %868 = vmatmul.mubr.bf16.gmra.mxu0 %v748
      %v869 = vpop.f32.mrf.mxu0
      %v870 = vadd.f32 %v785, %v869
      %v871 = vpop.f32.mrf.mxu0
      %v872 = vpop.f32.mrf.mxu0
      %v873 = vadd.f32 %v785, %v872
      %v874 = vpop.f32.mrf.mxu0
      %875 = vmatprep.mubr.bf16.mxu0 0
      %876 = vmatmul.mubr.bf16.gmra.mxu0 %v749
      %v877 = vpop.f32.mrf.mxu0
      %v878 = vadd.f32 %v785, %v877
      %v879 = vpop.f32.mrf.mxu0
      %v880 = vpop.f32.mrf.mxu0
      %v881 = vadd.f32 %v785, %v880
      %v882 = vpop.f32.mrf.mxu0
      %883 = vmatprep.mubr.bf16.mxu0 0
      %884 = vmatmul.mubr.bf16.gmra.mxu0 %v750
      %v885 = vpop.f32.mrf.mxu0
      %v886 = vadd.f32 %v785, %v885
      %v887 = vpop.f32.mrf.mxu0
      %v888 = vpop.f32.mrf.mxu0
      %v889 = vadd.f32 %v785, %v888
      %v890 = vpop.f32.mrf.mxu0
      %891 = vmatprep.mubr.bf16.mxu0 0
      %892 = vmatmul.mubr.bf16.gmra.mxu0 %v751
      %v893 = vpop.f32.mrf.mxu0
      %v894 = vadd.f32 %v785, %v893
      %v895 = vpop.f32.mrf.mxu0
      %v896 = vpop.f32.mrf.mxu0
      %v897 = vadd.f32 %v785, %v896
      %v898 = vpop.f32.mrf.mxu0
      %899 = vmatprep.mubr.bf16.mxu0 0
      %900 = vmatmul.mubr.bf16.gmra.mxu0 %v752
      %v901 = vpop.f32.mrf.mxu0
      %v902 = vadd.f32 %v785, %v901
      %v903 = vpop.f32.mrf.mxu0
      %v904 = vpop.f32.mrf.mxu0
      %v905 = vadd.f32 %v785, %v904
      %v906 = vpop.f32.mrf.mxu0
      %907 = vmatprep.mubr.bf16.mxu0 0
      %908 = vmatmul.mubr.bf16.gmra.mxu0 %v753
      %v909 = vpop.f32.mrf.mxu0
      %v910 = vadd.f32 %v785, %v909
      %v911 = vpop.f32.mrf.mxu0
      %v912 = vpop.f32.mrf.mxu0
      %v913 = vadd.f32 %v785, %v912
      %v914 = vpop.f32.mrf.mxu0
      %915 = vmatprep.mubr.bf16.mxu0 0
      %916 = vmatmul.mubr.bf16.gmra.mxu0 %v754
      %v917 = vpop.f32.mrf.mxu0
      %v918 = vadd.f32 %v785, %v917
      %v919 = vpop.f32.mrf.mxu0
      %v920 = vpop.f32.mrf.mxu0
      %v921 = vadd.f32 %v785, %v920
      %v922 = vpop.f32.mrf.mxu0
      %923 = vmatprep.mubr.bf16.mxu0 0
      %924 = vmatmul.mubr.bf16.gmra.mxu0 %v755
      %v925 = vpop.f32.mrf.mxu0
      %v926 = vadd.f32 %v785, %v925
      %v927 = vpop.f32.mrf.mxu0
      %v928 = vpop.f32.mrf.mxu0
      %v929 = vadd.f32 %v785, %v928
      %v930 = vpop.f32.mrf.mxu0
      %931 = vmatprep.mubr.bf16.mxu0 0
      %932 = vmatmul.mubr.bf16.gmra.mxu0 %v756
      %v933 = vpop.f32.mrf.mxu0
      %v934 = vadd.f32 %v785, %v933
      %v935 = vpop.f32.mrf.mxu0
      %v936 = vpop.f32.mrf.mxu0
      %v937 = vadd.f32 %v785, %v936
      %v938 = vpop.f32.mrf.mxu0
      %939 = vmatprep.mubr.bf16.mxu0 0
      %940 = vmatmul.mubr.bf16.gmra.mxu0 %v757
      %v941 = vpop.f32.mrf.mxu0
      %v942 = vadd.f32 %v785, %v941
      %v943 = vpop.f32.mrf.mxu0
      %v944 = vpop.f32.mrf.mxu0
      %v945 = vadd.f32 %v785, %v944
      %v946 = vpop.f32.mrf.mxu0
      %947 = vmatprep.mubr.bf16.mxu0 0
      %948 = vmatmul.mubr.bf16.gmra.mxu0 %v758
      %v949 = vpop.f32.mrf.mxu0
      %v950 = vadd.f32 %v785, %v949
      %v951 = vpop.f32.mrf.mxu0
      %v952 = vpop.f32.mrf.mxu0
      %v953 = vadd.f32 %v785, %v952
      %v954 = vpop.f32.mrf.mxu0
      %955 = vmatprep.mubr.bf16.mxu0 0
      %956 = vmatmul.mubr.bf16.gmra.mxu0 %v759
      %v957 = vpop.f32.mrf.mxu0
      %v958 = vadd.f32 %v785, %v957
      %v959 = vpop.f32.mrf.mxu0
      %v960 = vpop.f32.mrf.mxu0
      %v961 = vadd.f32 %v785, %v960
      %v962 = vpop.f32.mrf.mxu0
      %963 = vmatprep.mubr.bf16.mxu0 0
      %964 = vmatmul.mubr.bf16.gmra.mxu0 %v760
      %v965 = vpop.f32.mrf.mxu0
      %v966 = vadd.f32 %v785, %v965
      %v967 = vpop.f32.mrf.mxu0
      %v968 = vpop.f32.mrf.mxu0
      %v969 = vadd.f32 %v785, %v968
      %v970 = vpop.f32.mrf.mxu0
      %971 = vmatprep.mubr.bf16.mxu0 0
      %972 = vmatmul.mubr.bf16.gmra.mxu0 %v761
      %v973 = vpop.f32.mrf.mxu0
      %v974 = vadd.f32 %v785, %v973
      %v975 = vpop.f32.mrf.mxu0
      %v976 = vpop.f32.mrf.mxu0
      %v977 = vadd.f32 %v785, %v976
      %v978 = vpop.f32.mrf.mxu0
      %979 = vmatprep.mubr.bf16.mxu0 0
      %980 = vmatmul.mubr.bf16.gmra.mxu0 %v762
      %v981 = vpop.f32.mrf.mxu0
      %v982 = vadd.f32 %v785, %v981
      %v983 = vpop.f32.mrf.mxu0
      %v984 = vpop.f32.mrf.mxu0
      %v985 = vadd.f32 %v785, %v984
      %v986 = vpop.f32.mrf.mxu0
      %987 = vmatprep.mubr.bf16.mxu0 0
      %988 = vmatmul.mubr.bf16.gmra.mxu0 %v763
      %v989 = vpop.f32.mrf.mxu0
      %v990 = vadd.f32 %v785, %v989
      %v991 = vpop.f32.mrf.mxu0
      %v992 = vpop.f32.mrf.mxu0
      %v993 = vadd.f32 %v785, %v992
      %v994 = vpop.f32.mrf.mxu0
      %995 = vdwg.mxu0
      %v996 = vmax.f32 %v870, 0.0
      %v997 = vmax.f32 %v873, 0.0
      %v998 = vmax.f32 %v878, 0.0
      %v999 = vmax.f32 %v881, 0.0
      %v1000 = vmax.f32 %v886, 0.0
      %v1001 = vmax.f32 %v889, 0.0
      %v1002 = vmax.f32 %v894, 0.0
      %v1003 = vmax.f32 %v897, 0.0
      %v1004 = vmax.f32 %v902, 0.0
      %v1005 = vmax.f32 %v905, 0.0
      %v1006 = vmax.f32 %v910, 0.0
      %v1007 = vmax.f32 %v913, 0.0
      %v1008 = vmax.f32 %v918, 0.0
      %v1009 = vmax.f32 %v921, 0.0
      %v1010 = vmax.f32 %v926, 0.0
      %v1011 = vmax.f32 %v929, 0.0
      %v1012 = vmax.f32 %v934, 0.0
      %v1013 = vmax.f32 %v937, 0.0
      %v1014 = vmax.f32 %v942, 0.0
      %v1015 = vmax.f32 %v945, 0.0
      %v1016 = vmax.f32 %v950, 0.0
      %v1017 = vmax.f32 %v953, 0.0
      %v1018 = vmax.f32 %v958, 0.0
      %v1019 = vmax.f32 %v961, 0.0
      %v1020 = vmax.f32 %v966, 0.0
      %v1021 = vmax.f32 %v969, 0.0
      %v1022 = vmax.f32 %v974, 0.0
      %v1023 = vmax.f32 %v977, 0.0
      %v1024 = vmax.f32 %v982, 0.0
      %v1025 = vmax.f32 %v985, 0.0
      %v1026 = vmax.f32 %v990, 0.0
      %v1027 = vmax.f32 %v993, 0.0
      %v1028 = vpack.c.bf16 %v997, %v996
      %v1029 = vpack.c.bf16 %v999, %v998
      %v1030 = vpack.c.bf16 %v1001, %v1000
      %v1031 = vpack.c.bf16 %v1003, %v1002
      %v1032 = vpack.c.bf16 %v1005, %v1004
      %v1033 = vpack.c.bf16 %v1007, %v1006
      %v1034 = vpack.c.bf16 %v1009, %v1008
      %v1035 = vpack.c.bf16 %v1011, %v1010
      %v1036 = vpack.c.bf16 %v1013, %v1012
      %v1037 = vpack.c.bf16 %v1015, %v1014
      %v1038 = vpack.c.bf16 %v1017, %v1016
      %v1039 = vpack.c.bf16 %v1019, %v1018
      %v1040 = vpack.c.bf16 %v1021, %v1020
      %v1041 = vpack.c.bf16 %v1023, %v1022
      %v1042 = vpack.c.bf16 %v1025, %v1024
      %v1043 = vpack.c.bf16 %v1027, %v1026
      %v1044 = vld [vmem:[%s5] sm:$0xf]
      %v1045 = vld [vmem:[%s5 + $0x4] sm:$0xf]
      %v1046 = vld [vmem:[%s5 + $0x8] sm:$0xf]
      %v1047 = vld [vmem:[%s5 + $0xc] sm:$0xf]
      %v1048 = vld [vmem:[%s5 + $0x10] sm:$0xf]
      %v1049 = vld [vmem:[%s5 + $0x14] sm:$0xf]
      %v1050 = vld [vmem:[%s5 + $0x18] sm:$0xf]
      %v1051 = vld [vmem:[%s5 + $0x1c] sm:$0xf]
      %v1052 = vld [vmem:[%s5 + $0x20] sm:$0xf]
      %v1053 = vld [vmem:[%s5 + $0x24] sm:$0xf]
      %v1054 = vld [vmem:[%s5 + $0x28] sm:$0xf]
      %v1055 = vld [vmem:[%s5 + $0x2c] sm:$0xf]
      %v1056 = vld [vmem:[%s5 + $0x30] sm:$0xf]
      %v1057 = vld [vmem:[%s5 + $0x34] sm:$0xf]
      %v1058 = vld [vmem:[%s5 + $0x38] sm:$0xf]
      %v1059 = vld [vmem:[%s5 + $0x3c] sm:$0xf]
      %v1060 = vld [vmem:[%s6] sm:$0x1]
      %v1062 = vlaneseq
      %v1063 = vshrl.u32 %v1062, 7
      %v1064 = vsub.s32 0, %v1063
      %v1065 = vrot.slane %v1060, %v1064
      %v1083 = vunpack.c.l.b16 %v1044
      %v1084 = vunpack.c.l.b16 %v1045
      %v1085 = vunpack.c.l.b16 %v1046
      %v1086 = vunpack.c.l.b16 %v1047
      %v1087 = vunpack.c.l.b16 %v1048
      %v1088 = vunpack.c.l.b16 %v1049
      %v1089 = vunpack.c.l.b16 %v1050
      %v1090 = vunpack.c.l.b16 %v1051
      %v1091 = vunpack.c.l.b16 %v1052
      %v1092 = vunpack.c.l.b16 %v1053
      %v1093 = vunpack.c.l.b16 %v1054
      %v1094 = vunpack.c.l.b16 %v1055
      %v1095 = vunpack.c.l.b16 %v1056
      %v1096 = vunpack.c.l.b16 %v1057
      %v1097 = vunpack.c.l.b16 %v1058
      %v1098 = vunpack.c.l.b16 %v1059
      %v1099 = vpack.c.b16 %v1084, %v1083
      %v1100 = vpack.c.b16 %v1086, %v1085
      %v1101 = vpack.c.b16 %v1088, %v1087
      %v1102 = vpack.c.b16 %v1090, %v1089
      %v1103 = vpack.c.b16 %v1092, %v1091
      %v1104 = vpack.c.b16 %v1094, %v1093
      %v1105 = vpack.c.b16 %v1096, %v1095
      %v1106 = vpack.c.b16 %v1098, %v1097
      %1115 = vmatprep.subr.bf16.mxu0 0
      %1116 = vmatpush1.bf16.msra.mxu0 %v1106
      %1117 = vmatprep.subr.bf16.mxu0 0
      %1118 = vmatpush1.bf16.msra.mxu0 %v1105
      %1119 = vmatprep.subr.bf16.mxu0 0
      %1120 = vmatpush1.bf16.msra.mxu0 %v1104
      %1121 = vmatprep.subr.bf16.mxu0 0
      %1122 = vmatpush1.bf16.msra.mxu0 %v1103
      %1123 = vmatprep.subr.bf16.mxu0 0
      %1124 = vmatpush1.bf16.msra.mxu0 %v1102
      %1125 = vmatprep.subr.bf16.mxu0 0
      %1126 = vmatpush1.bf16.msra.mxu0 %v1101
      %1127 = vmatprep.subr.bf16.mxu0 0
      %1128 = vmatpush1.bf16.msra.mxu0 %v1100
      %1129 = vmatprep.subr.bf16.mxu0 0
      %1130 = vmatpush1.bf16.msra.mxu0 %v1099
      %1131 = vmatprep.subr.bf16.mxu0 0
      %1132 = vmatpush2.bf16.msra.mxu0 0
      %1133 = vmatprep.subr.bf16.mxu0 0
      %1134 = vmatpush2.bf16.msra.mxu0 0
      %1135 = vmatprep.subr.bf16.mxu0 0
      %1136 = vmatpush2.bf16.msra.mxu0 0
      %1137 = vmatprep.subr.bf16.mxu0 0
      %1138 = vmatpush2.bf16.msra.mxu0 0
      %1139 = vmatprep.subr.bf16.mxu0 0
      %1140 = vmatpush2.bf16.msra.mxu0 0
      %1141 = vmatprep.subr.bf16.mxu0 0
      %1142 = vmatpush2.bf16.msra.mxu0 0
      %1143 = vmatprep.subr.bf16.mxu0 0
      %1144 = vmatpush2.bf16.msra.mxu0 0
      %1145 = vmatprep.subr.bf16.mxu0 0
      %1146 = vmatpush2.bf16.msra.mxu0 0
      %1147 = vmatprep.mubr.bf16.mxu0 0
      %1148 = vmatmul.mubr.bf16.gmra.mxu0 %v1028
      %v1149 = vpop.f32.mrf.mxu0
      %v1150 = vadd.f32 %v1065, %v1149
      %v1151 = vpop.f32.mrf.mxu0
      %v1152 = vpop.f32.mrf.mxu0
      %v1153 = vadd.f32 %v1065, %v1152
      %v1154 = vpop.f32.mrf.mxu0
      %1155 = vmatprep.mubr.bf16.mxu0 0
      %1156 = vmatmul.mubr.bf16.gmra.mxu0 %v1029
      %v1157 = vpop.f32.mrf.mxu0
      %v1158 = vadd.f32 %v1065, %v1157
      %v1159 = vpop.f32.mrf.mxu0
      %v1160 = vpop.f32.mrf.mxu0
      %v1161 = vadd.f32 %v1065, %v1160
      %v1162 = vpop.f32.mrf.mxu0
      %1163 = vmatprep.mubr.bf16.mxu0 0
      %1164 = vmatmul.mubr.bf16.gmra.mxu0 %v1030
      %v1165 = vpop.f32.mrf.mxu0
      %v1166 = vadd.f32 %v1065, %v1165
      %v1167 = vpop.f32.mrf.mxu0
      %v1168 = vpop.f32.mrf.mxu0
      %v1169 = vadd.f32 %v1065, %v1168
      %v1170 = vpop.f32.mrf.mxu0
      %1171 = vmatprep.mubr.bf16.mxu0 0
      %1172 = vmatmul.mubr.bf16.gmra.mxu0 %v1031
      %v1173 = vpop.f32.mrf.mxu0
      %v1174 = vadd.f32 %v1065, %v1173
      %v1175 = vpop.f32.mrf.mxu0
      %v1176 = vpop.f32.mrf.mxu0
      %v1177 = vadd.f32 %v1065, %v1176
      %v1178 = vpop.f32.mrf.mxu0
      %1179 = vmatprep.mubr.bf16.mxu0 0
      %1180 = vmatmul.mubr.bf16.gmra.mxu0 %v1032
      %v1181 = vpop.f32.mrf.mxu0
      %v1182 = vadd.f32 %v1065, %v1181
      %v1183 = vpop.f32.mrf.mxu0
      %v1184 = vpop.f32.mrf.mxu0
      %v1185 = vadd.f32 %v1065, %v1184
      %v1186 = vpop.f32.mrf.mxu0
      %1187 = vmatprep.mubr.bf16.mxu0 0
      %1188 = vmatmul.mubr.bf16.gmra.mxu0 %v1033
      %v1189 = vpop.f32.mrf.mxu0
      %v1190 = vadd.f32 %v1065, %v1189
      %v1191 = vpop.f32.mrf.mxu0
      %v1192 = vpop.f32.mrf.mxu0
      %v1193 = vadd.f32 %v1065, %v1192
      %v1194 = vpop.f32.mrf.mxu0
      %1195 = vmatprep.mubr.bf16.mxu0 0
      %1196 = vmatmul.mubr.bf16.gmra.mxu0 %v1034
      %v1197 = vpop.f32.mrf.mxu0
      %v1198 = vadd.f32 %v1065, %v1197
      %v1199 = vpop.f32.mrf.mxu0
      %v1200 = vpop.f32.mrf.mxu0
      %v1201 = vadd.f32 %v1065, %v1200
      %v1202 = vpop.f32.mrf.mxu0
      %1203 = vmatprep.mubr.bf16.mxu0 0
      %1204 = vmatmul.mubr.bf16.gmra.mxu0 %v1035
      %v1205 = vpop.f32.mrf.mxu0
      %v1206 = vadd.f32 %v1065, %v1205
      %v1207 = vpop.f32.mrf.mxu0
      %v1208 = vpop.f32.mrf.mxu0
      %v1209 = vadd.f32 %v1065, %v1208
      %v1210 = vpop.f32.mrf.mxu0
      %1211 = vmatprep.mubr.bf16.mxu0 0
      %1212 = vmatmul.mubr.bf16.gmra.mxu0 %v1036
      %v1213 = vpop.f32.mrf.mxu0
      %v1214 = vadd.f32 %v1065, %v1213
      %v1215 = vpop.f32.mrf.mxu0
      %v1216 = vpop.f32.mrf.mxu0
      %v1217 = vadd.f32 %v1065, %v1216
      %v1218 = vpop.f32.mrf.mxu0
      %1219 = vmatprep.mubr.bf16.mxu0 0
      %1220 = vmatmul.mubr.bf16.gmra.mxu0 %v1037
      %v1221 = vpop.f32.mrf.mxu0
      %v1222 = vadd.f32 %v1065, %v1221
      %v1223 = vpop.f32.mrf.mxu0
      %v1224 = vpop.f32.mrf.mxu0
      %v1225 = vadd.f32 %v1065, %v1224
      %v1226 = vpop.f32.mrf.mxu0
      %1227 = vmatprep.mubr.bf16.mxu0 0
      %1228 = vmatmul.mubr.bf16.gmra.mxu0 %v1038
      %v1229 = vpop.f32.mrf.mxu0
      %v1230 = vadd.f32 %v1065, %v1229
      %v1231 = vpop.f32.mrf.mxu0
      %v1232 = vpop.f32.mrf.mxu0
      %v1233 = vadd.f32 %v1065, %v1232
      %v1234 = vpop.f32.mrf.mxu0
      %1235 = vmatprep.mubr.bf16.mxu0 0
      %1236 = vmatmul.mubr.bf16.gmra.mxu0 %v1039
      %v1237 = vpop.f32.mrf.mxu0
      %v1238 = vadd.f32 %v1065, %v1237
      %v1239 = vpop.f32.mrf.mxu0
      %v1240 = vpop.f32.mrf.mxu0
      %v1241 = vadd.f32 %v1065, %v1240
      %v1242 = vpop.f32.mrf.mxu0
      %1243 = vmatprep.mubr.bf16.mxu0 0
      %1244 = vmatmul.mubr.bf16.gmra.mxu0 %v1040
      %v1245 = vpop.f32.mrf.mxu0
      %v1246 = vadd.f32 %v1065, %v1245
      %v1247 = vpop.f32.mrf.mxu0
      %v1248 = vpop.f32.mrf.mxu0
      %v1249 = vadd.f32 %v1065, %v1248
      %v1250 = vpop.f32.mrf.mxu0
      %1251 = vmatprep.mubr.bf16.mxu0 0
      %1252 = vmatmul.mubr.bf16.gmra.mxu0 %v1041
      %v1253 = vpop.f32.mrf.mxu0
      %v1254 = vadd.f32 %v1065, %v1253
      %v1255 = vpop.f32.mrf.mxu0
      %v1256 = vpop.f32.mrf.mxu0
      %v1257 = vadd.f32 %v1065, %v1256
      %v1258 = vpop.f32.mrf.mxu0
      %1259 = vmatprep.mubr.bf16.mxu0 0
      %1260 = vmatmul.mubr.bf16.gmra.mxu0 %v1042
      %v1261 = vpop.f32.mrf.mxu0
      %v1262 = vadd.f32 %v1065, %v1261
      %v1263 = vpop.f32.mrf.mxu0
      %v1264 = vpop.f32.mrf.mxu0
      %v1265 = vadd.f32 %v1065, %v1264
      %v1266 = vpop.f32.mrf.mxu0
      %1267 = vmatprep.mubr.bf16.mxu0 0
      %1268 = vmatmul.mubr.bf16.gmra.mxu0 %v1043
      %v1269 = vpop.f32.mrf.mxu0
      %v1270 = vadd.f32 %v1065, %v1269
      %v1271 = vpop.f32.mrf.mxu0
      %v1272 = vpop.f32.mrf.mxu0
      %v1273 = vadd.f32 %v1065, %v1272
      %v1274 = vpop.f32.mrf.mxu0
      %1275 = vdwg.mxu0
      %v1276 = vxor.u32 %v1150, 2147483648
      %v1277 = vxor.u32 %v1153, 2147483648
      %v1278 = vxor.u32 %v1158, 2147483648
      %v1279 = vxor.u32 %v1161, 2147483648
      %v1280 = vxor.u32 %v1166, 2147483648
      %v1281 = vxor.u32 %v1169, 2147483648
      %v1282 = vxor.u32 %v1174, 2147483648
      %v1283 = vxor.u32 %v1177, 2147483648
      %v1284 = vxor.u32 %v1182, 2147483648
      %v1285 = vxor.u32 %v1185, 2147483648
      %v1286 = vxor.u32 %v1190, 2147483648
      %v1287 = vxor.u32 %v1193, 2147483648
      %v1288 = vxor.u32 %v1198, 2147483648
      %v1289 = vxor.u32 %v1201, 2147483648
      %v1290 = vxor.u32 %v1206, 2147483648
      %v1291 = vxor.u32 %v1209, 2147483648
      %v1292 = vxor.u32 %v1214, 2147483648
      %v1293 = vxor.u32 %v1217, 2147483648
      %v1294 = vxor.u32 %v1222, 2147483648
      %v1295 = vxor.u32 %v1225, 2147483648
      %v1296 = vxor.u32 %v1230, 2147483648
      %v1297 = vxor.u32 %v1233, 2147483648
      %v1298 = vxor.u32 %v1238, 2147483648
      %v1299 = vxor.u32 %v1241, 2147483648
      %v1300 = vxor.u32 %v1246, 2147483648
      %v1301 = vxor.u32 %v1249, 2147483648
      %v1302 = vxor.u32 %v1254, 2147483648
      %v1303 = vxor.u32 %v1257, 2147483648
      %v1304 = vxor.u32 %v1262, 2147483648
      %v1305 = vxor.u32 %v1265, 2147483648
      %v1306 = vxor.u32 %v1270, 2147483648
      %v1307 = vxor.u32 %v1273, 2147483648
      %v1308 = vmul.f32 %v1276, 1.442695
      %v1309 = vpow.pop %v1308
      %v1310 = vmul.f32 %v1277, 1.442695
      %v1311 = vpow.pop %v1310
      %v1312 = vmul.f32 %v1278, 1.442695
      %v1313 = vpow.pop %v1312
      %v1314 = vmul.f32 %v1279, 1.442695
      %v1315 = vpow.pop %v1314
      %v1316 = vmul.f32 %v1280, 1.442695
      %v1317 = vpow.pop %v1316
      %v1318 = vmul.f32 %v1281, 1.442695
      %v1319 = vpow.pop %v1318
      %v1320 = vmul.f32 %v1282, 1.442695
      %v1321 = vpow.pop %v1320
      %v1322 = vmul.f32 %v1283, 1.442695
      %v1323 = vpow.pop %v1322
      %v1324 = vmul.f32 %v1284, 1.442695
      %v1325 = vpow.pop %v1324
      %v1326 = vmul.f32 %v1285, 1.442695
      %v1327 = vpow.pop %v1326
      %v1328 = vmul.f32 %v1286, 1.442695
      %v1329 = vpow.pop %v1328
      %v1330 = vmul.f32 %v1287, 1.442695
      %v1331 = vpow.pop %v1330
      %v1332 = vmul.f32 %v1288, 1.442695
      %v1333 = vpow.pop %v1332
      %v1334 = vmul.f32 %v1289, 1.442695
      %v1335 = vpow.pop %v1334
      %v1336 = vmul.f32 %v1290, 1.442695
      %v1337 = vpow.pop %v1336
      %v1338 = vmul.f32 %v1291, 1.442695
      %v1339 = vpow.pop %v1338
      %v1340 = vmul.f32 %v1292, 1.442695
      %v1341 = vpow.pop %v1340
      %v1342 = vmul.f32 %v1293, 1.442695
      %v1343 = vpow.pop %v1342
      %v1344 = vmul.f32 %v1294, 1.442695
      %v1345 = vpow.pop %v1344
      %v1346 = vmul.f32 %v1295, 1.442695
      %v1347 = vpow.pop %v1346
      %v1348 = vmul.f32 %v1296, 1.442695
      %v1349 = vpow.pop %v1348
      %v1350 = vmul.f32 %v1297, 1.442695
      %v1351 = vpow.pop %v1350
      %v1352 = vmul.f32 %v1298, 1.442695
      %v1353 = vpow.pop %v1352
      %v1354 = vmul.f32 %v1299, 1.442695
      %v1355 = vpow.pop %v1354
      %v1356 = vmul.f32 %v1300, 1.442695
      %v1357 = vpow.pop %v1356
      %v1358 = vmul.f32 %v1301, 1.442695
      %v1359 = vpow.pop %v1358
      %v1360 = vmul.f32 %v1302, 1.442695
      %v1361 = vpow.pop %v1360
      %v1362 = vmul.f32 %v1303, 1.442695
      %v1363 = vpow.pop %v1362
      %v1364 = vmul.f32 %v1304, 1.442695
      %v1365 = vpow.pop %v1364
      %v1366 = vmul.f32 %v1305, 1.442695
      %v1367 = vpow.pop %v1366
      %v1368 = vmul.f32 %v1306, 1.442695
      %v1369 = vpow.pop %v1368
      %v1370 = vmul.f32 %v1307, 1.442695
      %v1371 = vpow.pop %v1370
      %v1372 = vadd.f32 %v1309, 1.0
      %v1373 = vadd.f32 %v1311, 1.0
      %v1374 = vadd.f32 %v1313, 1.0
      %v1375 = vadd.f32 %v1315, 1.0
      %v1376 = vadd.f32 %v1317, 1.0
      %v1377 = vadd.f32 %v1319, 1.0
      %v1378 = vadd.f32 %v1321, 1.0
      %v1379 = vadd.f32 %v1323, 1.0
      %v1380 = vadd.f32 %v1325, 1.0
      %v1381 = vadd.f32 %v1327, 1.0
      %v1382 = vadd.f32 %v1329, 1.0
      %v1383 = vadd.f32 %v1331, 1.0
      %v1384 = vadd.f32 %v1333, 1.0
      %v1385 = vadd.f32 %v1335, 1.0
      %v1386 = vadd.f32 %v1337, 1.0
      %v1387 = vadd.f32 %v1339, 1.0
      %v1388 = vadd.f32 %v1341, 1.0
      %v1389 = vadd.f32 %v1343, 1.0
      %v1390 = vadd.f32 %v1345, 1.0
      %v1391 = vadd.f32 %v1347, 1.0
      %v1392 = vadd.f32 %v1349, 1.0
      %v1393 = vadd.f32 %v1351, 1.0
      %v1394 = vadd.f32 %v1353, 1.0
      %v1395 = vadd.f32 %v1355, 1.0
      %v1396 = vadd.f32 %v1357, 1.0
      %v1397 = vadd.f32 %v1359, 1.0
      %v1398 = vadd.f32 %v1361, 1.0
      %v1399 = vadd.f32 %v1363, 1.0
      %v1400 = vadd.f32 %v1365, 1.0
      %v1401 = vadd.f32 %v1367, 1.0
      %v1402 = vadd.f32 %v1369, 1.0
      %v1403 = vadd.f32 %v1371, 1.0
      %v1404 = vrcp.pop %v1372
      %v1405 = vmul.f32 1.0, %v1404
      %v1406 = vrcp.pop %v1373
      %v1407 = vmul.f32 1.0, %v1406
      %v1408 = vrcp.pop %v1374
      %v1409 = vmul.f32 1.0, %v1408
      %v1410 = vrcp.pop %v1375
      %v1411 = vmul.f32 1.0, %v1410
      %v1412 = vrcp.pop %v1376
      %v1413 = vmul.f32 1.0, %v1412
      %v1414 = vrcp.pop %v1377
      %v1415 = vmul.f32 1.0, %v1414
      %v1416 = vrcp.pop %v1378
      %v1417 = vmul.f32 1.0, %v1416
      %v1418 = vrcp.pop %v1379
      %v1419 = vmul.f32 1.0, %v1418
      %v1420 = vrcp.pop %v1380
      %v1421 = vmul.f32 1.0, %v1420
      %v1422 = vrcp.pop %v1381
      %v1423 = vmul.f32 1.0, %v1422
      %v1424 = vrcp.pop %v1382
      %v1425 = vmul.f32 1.0, %v1424
      %v1426 = vrcp.pop %v1383
      %v1427 = vmul.f32 1.0, %v1426
      %v1428 = vrcp.pop %v1384
      %v1429 = vmul.f32 1.0, %v1428
      %v1430 = vrcp.pop %v1385
      %v1431 = vmul.f32 1.0, %v1430
      %v1432 = vrcp.pop %v1386
      %v1433 = vmul.f32 1.0, %v1432
      %v1434 = vrcp.pop %v1387
      %v1435 = vmul.f32 1.0, %v1434
      %v1436 = vrcp.pop %v1388
      %v1437 = vmul.f32 1.0, %v1436
      %v1438 = vrcp.pop %v1389
      %v1439 = vmul.f32 1.0, %v1438
      %v1440 = vrcp.pop %v1390
      %v1441 = vmul.f32 1.0, %v1440
      %v1442 = vrcp.pop %v1391
      %v1443 = vmul.f32 1.0, %v1442
      %v1444 = vrcp.pop %v1392
      %v1445 = vmul.f32 1.0, %v1444
      %v1446 = vrcp.pop %v1393
      %v1447 = vmul.f32 1.0, %v1446
      %v1448 = vrcp.pop %v1394
      %v1449 = vmul.f32 1.0, %v1448
      %v1450 = vrcp.pop %v1395
      %v1451 = vmul.f32 1.0, %v1450
      %v1452 = vrcp.pop %v1396
      %v1453 = vmul.f32 1.0, %v1452
      %v1454 = vrcp.pop %v1397
      %v1455 = vmul.f32 1.0, %v1454
      %v1456 = vrcp.pop %v1398
      %v1457 = vmul.f32 1.0, %v1456
      %v1458 = vrcp.pop %v1399
      %v1459 = vmul.f32 1.0, %v1458
      %v1460 = vrcp.pop %v1400
      %v1461 = vmul.f32 1.0, %v1460
      %v1462 = vrcp.pop %v1401
      %v1463 = vmul.f32 1.0, %v1462
      %v1464 = vrcp.pop %v1402
      %v1465 = vmul.f32 1.0, %v1464
      %v1466 = vrcp.pop %v1403
      %v1467 = vmul.f32 1.0, %v1466
      %1468 = vst [vmem:[%s315] sm:$0xff] %v1405
      %1469 = vst [vmem:[%s315 + $0x8] sm:$0xff] %v1407
      %1470 = vst [vmem:[%s315 + $0x10] sm:$0xff] %v1409
      %1471 = vst [vmem:[%s315 + $0x18] sm:$0xff] %v1411
      %1472 = vst [vmem:[%s315 + $0x20] sm:$0xff] %v1413
      %1473 = vst [vmem:[%s315 + $0x28] sm:$0xff] %v1415
      %1474 = vst [vmem:[%s315 + $0x30] sm:$0xff] %v1417
      %1475 = vst [vmem:[%s315 + $0x38] sm:$0xff] %v1419
      %1476 = vst [vmem:[%s315 + $0x40] sm:$0xff] %v1421
      %1477 = vst [vmem:[%s315 + $0x48] sm:$0xff] %v1423
      %1478 = vst [vmem:[%s315 + $0x50] sm:$0xff] %v1425
      %1479 = vst [vmem:[%s315 + $0x58] sm:$0xff] %v1427
      %1480 = vst [vmem:[%s315 + $0x60] sm:$0xff] %v1429
      %1481 = vst [vmem:[%s315 + $0x68] sm:$0xff] %v1431
      %1482 = vst [vmem:[%s315 + $0x70] sm:$0xff] %v1433
      %1483 = vst [vmem:[%s315 + $0x78] sm:$0xff] %v1435
      %1484 = vst [vmem:[%s315 + $0x80] sm:$0xff] %v1437
      %1485 = vst [vmem:[%s315 + $0x88] sm:$0xff] %v1439
      %1486 = vst [vmem:[%s315 + $0x90] sm:$0xff] %v1441
      %1487 = vst [vmem:[%s315 + $0x98] sm:$0xff] %v1443
      %1488 = vst [vmem:[%s315 + $0xa0] sm:$0xff] %v1445
      %1489 = vst [vmem:[%s315 + $0xa8] sm:$0xff] %v1447
      %1490 = vst [vmem:[%s315 + $0xb0] sm:$0xff] %v1449
      %1491 = vst [vmem:[%s315 + $0xb8] sm:$0xff] %v1451
      %1492 = vst [vmem:[%s315 + $0xc0] sm:$0xff] %v1453
      %1493 = vst [vmem:[%s315 + $0xc8] sm:$0xff] %v1455
      %1494 = vst [vmem:[%s315 + $0xd0] sm:$0xff] %v1457
      %1495 = vst [vmem:[%s315 + $0xd8] sm:$0xff] %v1459
      %1496 = vst [vmem:[%s315 + $0xe0] sm:$0xff] %v1461
      %1497 = vst [vmem:[%s315 + $0xe8] sm:$0xff] %v1463
      %1498 = vst [vmem:[%s315 + $0xf0] sm:$0xff] %v1465
      %1499 = vst [vmem:[%s315 + $0xf8] sm:$0xff] %v1467
      %s1500 = smul.u32 32, %s20
      %p1501 = scmp.lt.s32.totalorder %s1500, 127
      %s1502 = scalar_select %p1501, %s1500, 127
      %s1503 = smul.addr %s1502, 8
      %s1504 = scalar_lea.vmem %s7, %s1503
      %s1505 = smul.u32 32, %s20
      %p1506 = scmp.lt.s32.totalorder %s1505, 127
      %s1507 = scalar_select %p1506, %s1505, 127
      %s1508 = smul.addr %s1507, 8
      %s1509 = scalar_lea.vmem %s8, %s1508
      // Predicated region
      $region49: #{fc_forward.1} parent=47 // pred_check
        %p1510 = pneg %p190
      $region50: #{fc_forward.1} parent=47 // pred_check_branch
        %1512 = sbr.rel (%p1510) target = $region52
      $region51: #{fc_forward.1} parent=47 // pred_region
        %s1513 = smul.u32 32, %s20
      $region52: #{fc_forward.1} parent=47 // pred_fallthru
        _
      // Predicated region
      $region53: #{fc_forward.1} parent=47 // pred_check
        %p1514 = pneg %p216
      $region54: #{fc_forward.1} parent=47 // pred_check_branch
        %1516 = sbr.rel (%p1514) target = $region56
      $region55: #{fc_forward.1} parent=47 // pred_region
        %s1517 = smul.u32 32, %s20
      $region56: #{fc_forward.1} parent=47 // pred_fallthru
        _
    $region48: #{fc_forward.1} parent=5 // pred_fallthru
      _
    %p1518 = scmp.le.s32.totalorder 2, %s15
    // Predicated region
    $region57: #{fc_forward.1} parent=5 // pred_check
      %p1519 = pneg %p1518
    $region58: #{fc_forward.1} parent=5 // pred_check_branch
      %1521 = sbr.rel (%p1519) target = $region60
    $region59: #{fc_forward.1} parent=5 // pred_region
      %s1522 = ssub.s32 %s15, 2
      // Predicated region
      $region61: #{fc_forward.1} parent=59 // pred_check
        %p1523 = pneg %p196
      $region62: #{fc_forward.1} parent=59 // pred_check_branch
        %1525 = sbr.rel (%p1523) target = $region64
      $region63: #{fc_forward.1} parent=59 // pred_region
        %s1526 = smul.u32 32, %s21
        %p1527 = scmp.lt.s32.totalorder %s1526, 127
        %s1528 = scalar_select %p1527, %s1526, 127
        %s1529 = smul.addr %s1528, 8
        %s1530 = scalar_lea.vmem %s7, %s1529
      $region64: #{fc_forward.1} parent=59 // pred_fallthru
        _
      // Predicated region
      $region65: #{fc_forward.1} parent=59 // pred_check
        %p1531 = pneg %p222
      $region66: #{fc_forward.1} parent=59 // pred_check_branch
        %1533 = sbr.rel (%p1531) target = $region68
      $region67: #{fc_forward.1} parent=59 // pred_region
        %s1534 = smul.u32 32, %s21
        %p1535 = scmp.lt.s32.totalorder %s1534, 127
        %s1536 = scalar_select %p1535, %s1534, 127
        %s1537 = smul.addr %s1536, 8
        %s1538 = scalar_lea.vmem %s8, %s1537
      $region68: #{fc_forward.1} parent=59 // pred_fallthru
        _
    $region60: #{fc_forward.1} parent=5 // pred_fallthru
      _
  $region6: #{fc_forward.1} parent=0 // loop_footer
    %s19 = sadd.s32 1, %s15
  $region7: #{fc_forward.1} parent=0 // loop_footer_branch
    %14 = sbr.rel target = $region3
  $region8: #{fc_forward.1} parent=0 // loop_exit
    _

</llo_original>
